<compile_context>
chip_gen: v6e
topology: v6e:2x2x1
jax: 0.10.0
libtpu: 0.0.40
codegen_flags: <defaults>
</compile_context>

<pallas_src>
import functools

import jax
import jax.numpy as jnp
from jax.experimental import pallas as pl
from jax.experimental.pallas import tpu as pltpu

SELU_ALPHA = 1.6732632423543772848170429916717
SELU_LAMBDA = 1.0507009873554804934193349852946


def _round_up(x, m):
    return (x + m - 1) // m * m


def _selu(y):
    # Clamp the exp argument so the discarded branch never overflows.
    neg = SELU_ALPHA * (jnp.exp(jnp.minimum(y, 0.0)) - 1.0)
    return SELU_LAMBDA * jnp.where(y > 0, y, neg)


def _default_row_tile():
    """256 rows fills the v6e/v7x 256-wide MXU; v5e's 128x128 MXU wants 128."""
    try:
        kind = jax.devices()[0].device_kind.lower()
        if "v5 lite" in kind or "v5e" in kind or "v5lite" in kind:
            return 128
    except Exception:
        pass
    return 256


def _row_padding(n, row_tile):
    """Pad rows to >=16 (bf16 sublane pack); small inputs get a single block."""
    np_ = _round_up(max(n, 1), 16)
    if np_ <= row_tile:
        return np_, np_          # one full-rows block, grid=(1,)
    return _round_up(n, row_tile), row_tile


# ----------------------------------------------------------------------------
# Pallas kernels
# ----------------------------------------------------------------------------
def _linear_kernel(x_ref, w_ref, b_ref, o_ref, *, apply_selu):
    # y = maybe_selu(x @ w + b); BN affine is pre-folded into (w, b).
    acc = jnp.dot(x_ref[...], w_ref[...], preferred_element_type=jnp.float32)
    y = acc + b_ref[...]
    if apply_selu:
        y = _selu(y)
    o_ref[...] = y.astype(o_ref.dtype)


def _edge_mlp_kernel(*refs, n_hidden):
    # refs = (hi, hj, [w, b] * n_hidden, out)
    # hi = (x_i @ W_i + b0) gathered per edge, hj = (x_j @ W_j) gathered per
    # edge (node-side projections computed by a separate Pallas matmul), so
    # the EdgeConv first layer reduces to a per-edge add + SELU here.  The
    # remaining Linear->BN->SELU layers (BN folded) run fully in VMEM.
    hi, hj = refs[0], refs[1]
    o_ref = refs[-1]
    h = _selu(hi[...].astype(jnp.float32) + hj[...].astype(jnp.float32))
    idx = 2
    for _ in range(n_hidden):
        w, b = refs[idx], refs[idx + 1]
        idx += 2
        h = _selu(jnp.dot(h.astype(w.dtype), w[...],
                          preferred_element_type=jnp.float32) + b[...])
    o_ref[...] = h.astype(o_ref.dtype)


def _readout_kernel(x_ref, w1_ref, b1_ref, w2_ref, b2_ref, o_ref):
    # logits = selu(x @ W1 + b1) @ W2 + b2   (norm1/norm2 folded into W1/W2)
    h = jnp.dot(x_ref[...], w1_ref[...], preferred_element_type=jnp.float32)
    h = _selu(h + b1_ref[...])
    o = jnp.dot(h.astype(w2_ref.dtype), w2_ref[...],
                preferred_element_type=jnp.float32) + b2_ref[...]
    o_ref[...] = o.astype(o_ref.dtype)


# ----------------------------------------------------------------------------
# Pallas wrappers (weights arrive pre-padded / pre-folded)
# ----------------------------------------------------------------------------
def fused_linear(x, lin, apply_selu=False, row_tile=256,
                 out_dtype=jnp.float32):
    """y = maybe_selu(x @ W + b) with bf16 operands, f32 accumulate."""
    N, K = x.shape
    Kp, Mp = lin["w"].shape
    M = lin["M"]
    Np, tile = _row_padding(N, row_tile)
    xp = jnp.zeros((Np, Kp), jnp.float32).at[:N, :K].set(x).astype(jnp.bfloat16)
    out = pl.pallas_call(
        functools.partial(_linear_kernel, apply_selu=apply_selu),
        out_shape=jax.ShapeDtypeStruct((Np, Mp), out_dtype),
        grid=(Np // tile,),
        in_specs=[
            pl.BlockSpec((tile, Kp), lambda i: (i, 0)),
            pl.BlockSpec((Kp, Mp), lambda i: (0, 0)),
            pl.BlockSpec((1, Mp), lambda i: (0, 0)),
        ],
        out_specs=pl.BlockSpec((tile, Mp), lambda i: (i, 0)),
        compiler_params=pltpu.CompilerParams(
            dimension_semantics=("parallel",)),
    )(xp, lin["w"], lin["b"])
    return out[:N, :M]


def _edge_mlp_call(hi, hj, blk, tile):
    Ep, Mp = hi.shape
    n_hidden = len(blk["hidden"])
    operands = [hi, hj]
    in_specs = [
        pl.BlockSpec((tile, Mp), lambda i: (i, 0)),
        pl.BlockSpec((tile, Mp), lambda i: (i, 0)),
    ]
    for (w, b) in blk["hidden"]:
        operands += [w, b]
        in_specs += [pl.BlockSpec((Mp, Mp), lambda i: (0, 0)),
                     pl.BlockSpec((1, Mp), lambda i: (0, 0))]
    # Resident weights: depth x (256x256 bf16) ~< 0.3 MB -> comfortably under
    # the default scoped VMEM limit on v5e/v6e/v7x.
    return pl.pallas_call(
        functools.partial(_edge_mlp_kernel, n_hidden=n_hidden),
        out_shape=jax.ShapeDtypeStruct((Ep, Mp), jnp.float32),
        grid=(Ep // tile,),
        in_specs=in_specs,
        out_specs=pl.BlockSpec((tile, Mp), lambda i: (i, 0)),
        compiler_params=pltpu.CompilerParams(
            dimension_semantics=("parallel",)),
    )(*operands)


def readout(feat, fc1, fc2):
    """Fused fc1 -> SELU -> fc2 on the pooled per-graph features (tiny)."""
    G, F = feat.shape
    Kp = fc1["w"].shape[0]
    M2p = fc2["w"].shape[1]
    Gp = _round_up(max(G, 1), 16)
    xp = jnp.zeros((Gp, Kp), jnp.float32).at[:G, :F].set(feat).astype(jnp.bfloat16)
    out = pl.pallas_call(
        _readout_kernel,
        out_shape=jax.ShapeDtypeStruct((Gp, M2p), jnp.float32),
    )(xp, fc1["w"], fc1["b"], fc2["w"], fc2["b"])
    return out[:G, :fc2["M"]]


# ----------------------------------------------------------------------------
# Graph ops (data-dependent gather / scatter stays in plain JAX)
# ----------------------------------------------------------------------------
def gat_conv(x, src, dst, p, bn, heads, out_dim, row_tile,
             negative_slope=0.2):
    """PyG-style GATConv (concat heads, add self loops, edge_dim=None),
    followed by BatchNorm(eval)+SELU folded into the scatter epilogue."""
    N = x.shape[0]
    h = fused_linear(x, p["lin"], apply_selu=False, row_tile=row_tile)
    h = h.reshape(N, heads, out_dim)

    loops = jnp.arange(N, dtype=src.dtype)           # add self loops
    src_f = jnp.concatenate([src, loops])
    dst_f = jnp.concatenate([dst, loops])

    alpha_src = (h * p["att_src"][None]).sum(-1)     # (N, heads)
    alpha_dst = (h * p["att_dst"][None]).sum(-1)     # (N, heads)
    alpha = alpha_src[src_f] + alpha_dst[dst_f]      # (Ef, heads)
    alpha = jnp.where(alpha > 0, alpha, negative_slope * alpha)

    # TODO(synk): the segment softmax / weighted scatter below stays in plain
    # JAX (XLA scatter); for large graphs a PrefetchScalarGridSpec Pallas
    # kernel over dst-sorted edges would keep h resident in VMEM.
    amax = jax.ops.segment_max(alpha, dst_f, num_segments=N)
    amax = jnp.where(jnp.isfinite(amax), amax, 0.0)
    ealpha = jnp.exp(alpha - amax[dst_f])
    denom = jax.ops.segment_sum(ealpha, dst_f, num_segments=N)
    attn = ealpha / jnp.maximum(denom[dst_f], 1e-16)

    msg = h[src_f] * attn[..., None]                 # (Ef, heads, out)
    out = jax.ops.segment_sum(msg, dst_f, num_segments=N)
    out = out.reshape(N, heads * out_dim)

    scale, shift = bn
    y = (out + p["bias"]) * scale + shift            # BN(eval) affine epilogue
    return _selu(y)                                  # fused by XLA with scatter


def edge_conv_block(x, src, dst, deg, blk, row_tile):
    """EdgeConv_lrp: mean aggregation of nn(cat[x_i, x_j]) over incoming edges.

    The first Linear of nn() is applied per NODE as proj = [x@W_i + b0 | x@W_j]
    (single Pallas matmul); per-edge work is a bf16 gather + fused MLP kernel.
    """
    N, C = x.shape
    M, Mp = blk["M"], blk["Mp"]

    proj = fused_linear(x, blk["lin0"], apply_selu=False, row_tile=row_tile,
                        out_dtype=jnp.bfloat16)      # (N, 2*Mp) bf16
    hi = proj[:, :Mp]                                # x_i (target) contribution
    hj = proj[:, Mp:]                                # x_j (source) contribution

    E = src.shape[0]
    Ep, tile = _row_padding(E, row_tile)
    src_p = jnp.zeros((Ep,), src.dtype).at[:E].set(src)
    dst_p = jnp.zeros((Ep,), dst.dtype).at[:E].set(dst)
    gi = hi[dst_p]                                   # (Ep, Mp) bf16
    gj = hj[src_p]                                   # (Ep, Mp) bf16

    h = _edge_mlp_call(gi, gj, blk, tile)            # (Ep, Mp) f32
    h = h[:E, :M]

    ssum = jax.ops.segment_sum(h, dst, num_segments=N)
    return ssum / deg[:, None]                       # mean aggregation


def global_mean_pool(x, batch, num_graphs):
    s = jax.ops.segment_sum(x, batch, num_segments=num_graphs)
    c = jax.ops.segment_sum(jnp.ones((x.shape[0],), jnp.float32), batch,
                            num_segments=num_graphs)
    return s / jnp.maximum(c, 1.0)[:, None]


# ----------------------------------------------------------------------------
# Parameter init + prep (BN folds + padding happen ONCE, here)
# ----------------------------------------------------------------------------
def _linear_raw(key, fan_in, fan_out):
    kw, kb = jax.random.split(key)
    bound = 1.0 / jnp.sqrt(jnp.float32(fan_in))
    w = jax.random.uniform(kw, (fan_in, fan_out), jnp.float32, -bound, bound)
    b = jax.random.uniform(kb, (fan_out,), jnp.float32, -bound, bound)
    return w, b


def _bn_affine(dim, eps=1e-5):
    # Fresh BatchNorm1d (eval): gamma=1, beta=0, mean=0, var=1.
    scale = jnp.ones((dim,), jnp.float32) / jnp.sqrt(1.0 + eps)
    shift = jnp.zeros((dim,), jnp.float32)
    return scale, shift


def _fold_bn_out(w, b, scale, shift):
    # Linear -> BN  ==>  x @ (w * s) + (b * s + t)
    return w * scale[None, :], b * scale + shift


def _fold_bn_in(w, b, scale, shift):
    # BN -> Linear  ==>  x @ (s[:,None] * w) + (t @ w + b)
    return scale[:, None] * w, b + shift @ w


def _pad_linear(w, b, dtype=jnp.bfloat16):
    K, M = w.shape
    Kp, Mp = _round_up(K, 128), _round_up(M, 128)
    wp = jnp.zeros((Kp, Mp), jnp.float32).at[:K, :M].set(w).astype(dtype)
    bp = jnp.zeros((1, Mp), jnp.float32).at[0, :M].set(b)
    return dict(w=wp, b=bp, K=K, M=M)


def init_params(key, nfs, gfs, num_classes, depth=2, heads=5):
    keys = jax.random.split(key, 64)
    ki = iter(keys)

    def nxt():
        return next(ki)

    p = {}
    dim_h = 2 * nfs

    # GAT 1: in=nfs, out=dim_h, heads     (lin has no bias in PyG GATConv)
    p["gat1"] = dict(
        lin=_pad_linear(_linear_raw(nxt(), nfs, heads * dim_h)[0],
                        jnp.zeros((heads * dim_h,), jnp.float32)),
        att_src=0.1 * jax.random.normal(nxt(), (heads, dim_h), jnp.float32),
        att_dst=0.1 * jax.random.normal(nxt(), (heads, dim_h), jnp.float32),
        bias=jnp.zeros((heads * dim_h,), jnp.float32),
    )
    p["gat_bn1"] = _bn_affine(heads * dim_h)

    # GAT 2: in=heads*dim_h, out=dim_h, heads=1
    p["gat2"] = dict(
        lin=_pad_linear(_linear_raw(nxt(), heads * dim_h, dim_h)[0],
                        jnp.zeros((dim_h,), jnp.float32)),
        att_src=0.1 * jax.random.normal(nxt(), (1, dim_h), jnp.float32),
        att_dst=0.1 * jax.random.normal(nxt(), (1, dim_h), jnp.float32),
        bias=jnp.zeros((dim_h,), jnp.float32),
    )
    p["gat_bn2"] = _bn_affine(dim_h)

    kernel_sizes = [2 * nfs, 256, 256]
    input_sizes = [kernel_sizes[0],
                   kernel_sizes[0] + kernel_sizes[1],
                   kernel_sizes[0] + kernel_sizes[1] + kernel_sizes[2]]

    edge_blocks = []
    for i in range(2):
        in_size = input_sizes[i]
        layer_size = kernel_sizes[i + 1]
        Mp = _round_up(layer_size, 128)

        w0, b0 = _linear_raw(nxt(), in_size * 2, layer_size)
        s0, t0 = _bn_affine(layer_size)
        w0, b0 = _fold_bn_out(w0, b0, s0, t0)
        # Node-side projection weight  [W_i | W_j]  (each half padded to Mp
        # columns so the two halves stay lane-aligned); bias b0 is attached to
        # the x_i half only so it is added exactly once per edge.
        w0i = jnp.zeros((in_size, Mp), jnp.float32).at[:, :layer_size].set(
            w0[:in_size])
        w0j = jnp.zeros((in_size, Mp), jnp.float32).at[:, :layer_size].set(
            w0[in_size:])
        w0cat = jnp.concatenate([w0i, w0j], axis=1)            # (in_size, 2*Mp)
        b0cat = jnp.zeros((2 * Mp,), jnp.float32).at[:layer_size].set(b0)
        lin0 = _pad_linear(w0cat, b0cat)                       # M = 2*Mp

        hidden = []
        for _ in range(depth):
            w, b = _linear_raw(nxt(), layer_size, layer_size)
            s, t = _bn_affine(layer_size)
            w, b = _fold_bn_out(w, b, s, t)
            wp = jnp.zeros((Mp, Mp), jnp.float32) \
                .at[:layer_size, :layer_size].set(w).astype(jnp.bfloat16)
            bp = jnp.zeros((1, Mp), jnp.float32).at[0, :layer_size].set(b)
            hidden.append((wp, bp))
        edge_blocks.append(dict(lin0=lin0, hidden=hidden,
                                C=in_size, M=layer_size, Mp=Mp))
    p["edge_blocks"] = edge_blocks

    # Readout: x -> norm1 -> fc1 -> SELU -> norm2 -> fc2  (BNs folded on the
    # input side of fc1/fc2, matching the PyTorch forward order).
    fc_in = input_sizes[-1] + gfs
    s1, t1 = _bn_affine(fc_in)
    w1, b1 = _linear_raw(nxt(), fc_in, 256)
    w1, b1 = _fold_bn_in(w1, b1, s1, t1)
    s2, t2 = _bn_affine(256)
    w2, b2 = _linear_raw(nxt(), 256, num_classes)
    w2, b2 = _fold_bn_in(w2, b2, s2, t2)
    p["fc1"] = _pad_linear(w1, b1)
    p["fc2"] = _pad_linear(w2, b2)

    p["dims"] = dict(nfs=nfs, gfs=gfs, num_classes=num_classes,
                     heads=heads, dim_h=dim_h)
    return p


# ----------------------------------------------------------------------------
# NuNet forward (params captured in closure -> static ints stay static)
# ----------------------------------------------------------------------------
def make_nunet_forward(params, num_graphs, row_tile):
    d = params["dims"]

    def fwd(x, u, edge_index, batch):
        src, dst = edge_index[0], edge_index[1]
        N = x.shape[0]
        E = src.shape[0]

        # --- GATConvBlock (nodeblock): GAT -> BN -> SELU, twice ---
        h = gat_conv(x, src, dst, params["gat1"], params["gat_bn1"],
                     heads=d["heads"], out_dim=d["dim_h"], row_tile=row_tile)
        h = gat_conv(h, src, dst, params["gat2"], params["gat_bn2"],
                     heads=1, out_dim=d["dim_h"], row_tile=row_tile)

        # In-degree of every destination node, computed once and reused by
        # both EdgeConv mean aggregations.
        deg = jax.ops.segment_sum(jnp.ones((E,), jnp.float32), dst,
                                  num_segments=N)
        deg = jnp.maximum(deg, 1.0)

        # --- EdgeConv blocks with dense-skip concatenation ---
        xcur = h
        for blk in params["edge_blocks"]:
            out = edge_conv_block(xcur, src, dst, deg, blk, row_tile)
            xcur = jnp.concatenate([out, xcur], axis=1)

        # --- readout ---
        pooled = global_mean_pool(xcur, batch, num_graphs)
        feat = jnp.concatenate([pooled, u], axis=1)
        return readout(feat, params["fc1"], params["fc2"])

    return jax.jit(fwd)


# ----------------------------------------------------------------------------
# Demo
# ----------------------------------------------------------------------------
if __name__ == "__main__":
    key = jax.random.PRNGKey(0)
    k_param, k_x, k_u, k_ea = jax.random.split(key, 4)

    node_feat_size = 4
    global_feat_size = 3
    num_classes = 5
    num_graphs = 2
    nodes_per_graph = 6
    N = num_graphs * nodes_per_graph

    params = init_params(k_param, node_feat_size, global_feat_size,
                         num_classes, depth=2, heads=5)

    # Bidirectional ring within each graph (no self loops).
    srcs, dsts = [], []
    for g in range(num_graphs):
        off = g * nodes_per_graph
        for i in range(nodes_per_graph):
            j = (i + 1) % nodes_per_graph
            srcs += [off + i, off + j]
            dsts += [off + j, off + i]
    edge_index = jnp.array([srcs, dsts], dtype=jnp.int32)          # (2, E)
    E = edge_index.shape[1]

    x = jax.random.normal(k_x, (N, node_feat_size), jnp.float32)
    u = jax.random.normal(k_u, (num_graphs, global_feat_size), jnp.float32)
    edge_attr = jax.random.normal(k_ea, (E, 2), jnp.float32)  # ignored (edge_dim=None)
    batch = jnp.repeat(jnp.arange(num_graphs, dtype=jnp.int32),
                       nodes_per_graph)

    # TODO(synk): dropout layers run as identity (eval mode) and BatchNorm
    # uses freshly-initialised running statistics (eval mode).
    row_tile = _default_row_tile()
    fwd = make_nunet_forward(params, num_graphs, row_tile)
    out = jax.block_until_ready(fwd(x, u, edge_index, batch))

    assert out.shape == (num_graphs, num_classes), out.shape
    assert bool(jnp.all(jnp.isfinite(out)))
    print("KERNEL_OK")
</pallas_src>

<mosaic_0001>
module attributes {stable_mosaic.version = 11 : i64} {
  func.func private @main(%arg0: i32) attributes {dimension_semantics = [#tpu.dimension_semantics<core_parallel>], iteration_bounds = array<i64: 2>, tpu.core_type = #tpu.core_type<sc_scalar_subcore>, window_params = []} {
    return
  }
}

module attributes {stable_mosaic.version = 11 : i64} {
  func.func private @main(%arg0: i32) attributes {dimension_semantics = [#tpu.dimension_semantics<core_parallel>], iteration_bounds = array<i64: 2>, tpu.core_type = #tpu.core_type<sc_scalar_subcore>, window_params = []} {
    return
  }
}

module attributes {stable_mosaic.version = 11 : i64} {
  func.func @_linear_kernel(%arg0: i32, %arg1: memref<16x128xbf16, #tpu.memory_space<vmem>>, %arg2: memref<128x128xbf16, #tpu.memory_space<vmem>>, %arg3: memref<1x128xf32, #tpu.memory_space<vmem>>, %arg4: memref<16x128xf32, #tpu.memory_space<vmem>>) attributes {dimension_semantics = [#tpu.dimension_semantics<parallel>], iteration_bounds = array<i64: 1>, scalar_prefetch = 0 : i64, scratch_operands = 0 : i64, tpu.core_type = #tpu.core_type<tc>, window_params = [{transform_indices = @transform_0, window_bounds = array<i64: 16, 128>}, {pipeline_mode = #tpu.pipeline_mode<synchronous>, transform_indices = @transform_1, window_bounds = array<i64: 128, 128>}, {pipeline_mode = #tpu.pipeline_mode<synchronous>, transform_indices = @transform_2, window_bounds = array<i64: 1, 128>}, {transform_indices = @transform_3, window_bounds = array<i64: 16, 128>}]} {
    %c0 = arith.constant 0 : index
    %c0_0 = arith.constant 0 : index
    %0 = vector.load %arg1[%c0, %c0_0] : memref<16x128xbf16, #tpu.memory_space<vmem>>, vector<16x128xbf16>
    %c0_1 = arith.constant 0 : index
    %c0_2 = arith.constant 0 : index
    %1 = vector.load %arg2[%c0_1, %c0_2] : memref<128x128xbf16, #tpu.memory_space<vmem>>, vector<128x128xbf16>
    %cst = arith.constant dense<0.000000e+00> : vector<16x128xf32>
    %2 = tpu.matmul %0, %1, %cst {dimension_numbers = #tpu.dot_dimension_numbers<[1], [0], [0], [1], [0, 0, 1, 1], [], []>} : vector<16x128xbf16>, vector<128x128xbf16>, vector<16x128xf32> -> vector<16x128xf32>
    %c0_3 = arith.constant 0 : index
    %c0_4 = arith.constant 0 : index
    %3 = vector.load %arg3[%c0_3, %c0_4] : memref<1x128xf32, #tpu.memory_space<vmem>>, vector<1x128xf32>
    %4 = vector.broadcast %3 : vector<1x128xf32> to vector<16x128xf32>
    %5 = arith.addf %2, %4 : vector<16x128xf32>
    %c0_5 = arith.constant 0 : index
    %c0_6 = arith.constant 0 : index
    %6 = vector.load %arg4[%c0_5, %c0_6] : memref<16x128xf32, #tpu.memory_space<vmem>>, vector<16x128xf32>
    tpu.vector_store %arg4[%c0_5, %c0_6], %5 {strides = array<i32>} : memref<16x128xf32, #tpu.memory_space<vmem>>, vector<16x128xf32>,
    return
  }
  func.func @transform_0(%arg0: i32) -> (i32, i32) {
    %c0_i32 = arith.constant 0 : i32
    %c0_i32_0 = arith.constant 0 : i32
    return %arg0, %c0_i32 : i32, i32
  }
  func.func @transform_1(%arg0: i32) -> (i32, i32) {
    %c0_i32 = arith.constant 0 : i32
    %c0_i32_0 = arith.constant 0 : i32
    %c0_i32_1 = arith.constant 0 : i32
    return %c0_i32, %c0_i32_0 : i32, i32
  }
  func.func @transform_2(%arg0: i32) -> (i32, i32) {
    %c0_i32 = arith.constant 0 : i32
    %c0_i32_0 = arith.constant 0 : i32
    %c0_i32_1 = arith.constant 0 : i32
    return %c0_i32, %c0_i32_0 : i32, i32
  }
  func.func @transform_3(%arg0: i32) -> (i32, i32) {
    %c0_i32 = arith.constant 0 : i32
    %c0_i32_0 = arith.constant 0 : i32
    return %arg0, %c0_i32 : i32, i32
  }
}

module attributes {stable_mosaic.version = 11 : i64} {
  func.func @_linear_kernel(%arg0: i32, %arg1: memref<16x128xbf16, #tpu.memory_space<vmem>>, %arg2: memref<128x512xbf16, #tpu.memory_space<vmem>>, %arg3: memref<1x512xf32, #tpu.memory_space<vmem>>, %arg4: memref<16x512xbf16, #tpu.memory_space<vmem>>) attributes {dimension_semantics = [#tpu.dimension_semantics<parallel>], iteration_bounds = array<i64: 1>, scalar_prefetch = 0 : i64, scratch_operands = 0 : i64, tpu.core_type = #tpu.core_type<tc>, window_params = [{transform_indices = @transform_0, window_bounds = array<i64: 16, 128>}, {pipeline_mode = #tpu.pipeline_mode<synchronous>, transform_indices = @transform_1, window_bounds = array<i64: 128, 512>}, {pipeline_mode = #tpu.pipeline_mode<synchronous>, transform_indices = @transform_2, window_bounds = array<i64: 1, 512>}, {transform_indices = @transform_3, window_bounds = array<i64: 16, 512>}]} {
    %c0 = arith.constant 0 : index
    %c0_0 = arith.constant 0 : index
    %0 = vector.load %arg1[%c0, %c0_0] : memref<16x128xbf16, #tpu.memory_space<vmem>>, vector<16x128xbf16>
    %c0_1 = arith.constant 0 : index
    %c0_2 = arith.constant 0 : index
    %1 = vector.load %arg2[%c0_1, %c0_2] : memref<128x512xbf16, #tpu.memory_space<vmem>>, vector<128x512xbf16>
    %cst = arith.constant dense<0.000000e+00> : vector<16x512xf32>
    %2 = tpu.matmul %0, %1, %cst {dimension_numbers = #tpu.dot_dimension_numbers<[1], [0], [0], [1], [0, 0, 1, 1], [], []>} : vector<16x128xbf16>, vector<128x512xbf16>, vector<16x512xf32> -> vector<16x512xf32>
    %c0_3 = arith.constant 0 : index
    %c0_4 = arith.constant 0 : index
    %3 = vector.load %arg3[%c0_3, %c0_4] : memref<1x512xf32, #tpu.memory_space<vmem>>, vector<1x512xf32>
    %4 = vector.broadcast %3 : vector<1x512xf32> to vector<16x512xf32>
    %5 = arith.addf %2, %4 : vector<16x512xf32>
    %6 = arith.truncf %5 : vector<16x512xf32> to vector<16x512xbf16>
    %c0_5 = arith.constant 0 : index
    %c0_6 = arith.constant 0 : index
    %7 = vector.load %arg4[%c0_5, %c0_6] : memref<16x512xbf16, #tpu.memory_space<vmem>>, vector<16x512xbf16>
    tpu.vector_store %arg4[%c0_5, %c0_6], %6 {strides = array<i32>} : memref<16x512xbf16, #tpu.memory_space<vmem>>, vector<16x512xbf16>,
    return
  }
  func.func @transform_0(%arg0: i32) -> (i32, i32) {
    %c0_i32 = arith.constant 0 : i32
    %c0_i32_0 = arith.constant 0 : i32
    return %arg0, %c0_i32 : i32, i32
  }
  func.func @transform_1(%arg0: i32) -> (i32, i32) {
    %c0_i32 = arith.constant 0 : i32
    %c0_i32_0 = arith.constant 0 : i32
    %c0_i32_1 = arith.constant 0 : i32
    return %c0_i32, %c0_i32_0 : i32, i32
  }
  func.func @transform_2(%arg0: i32) -> (i32, i32) {
    %c0_i32 = arith.constant 0 : i32
    %c0_i32_0 = arith.constant 0 : i32
    %c0_i32_1 = arith.constant 0 : i32
    return %c0_i32, %c0_i32_0 : i32, i32
  }
  func.func @transform_3(%arg0: i32) -> (i32, i32) {
    %c0_i32 = arith.constant 0 : i32
    %c0_i32_0 = arith.constant 0 : i32
    return %arg0, %c0_i32 : i32, i32
  }
}

module attributes {stable_mosaic.version = 11 : i64} {
  func.func @_edge_mlp_kernel(%arg0: i32, %arg1: memref<32x256xbf16, #tpu.memory_space<vmem>>, %arg2: memref<32x256xbf16, #tpu.memory_space<vmem>>, %arg3: memref<256x256xbf16, #tpu.memory_space<vmem>>, %arg4: memref<1x256xf32, #tpu.memory_space<vmem>>, %arg5: memref<256x256xbf16, #tpu.memory_space<vmem>>, %arg6: memref<1x256xf32, #tpu.memory_space<vmem>>, %arg7: memref<32x256xf32, #tpu.memory_space<vmem>>) attributes {dimension_semantics = [#tpu.dimension_semantics<parallel>], iteration_bounds = array<i64: 1>, scalar_prefetch = 0 : i64, scratch_operands = 0 : i64, tpu.core_type = #tpu.core_type<tc>, window_params = [{transform_indices = @transform_0, window_bounds = array<i64: 32, 256>}, {transform_indices = @transform_1, window_bounds = array<i64: 32, 256>}, {pipeline_mode = #tpu.pipeline_mode<synchronous>, transform_indices = @transform_2, window_bounds = array<i64: 256, 256>}, {pipeline_mode = #tpu.pipeline_mode<synchronous>, transform_indices = @transform_3, window_bounds = array<i64: 1, 256>}, {pipeline_mode = #tpu.pipeline_mode<synchronous>, transform_indices = @transform_4, window_bounds = array<i64: 256, 256>}, {pipeline_mode = #tpu.pipeline_mode<synchronous>, transform_indices = @transform_5, window_bounds = array<i64: 1, 256>}, {transform_indices = @transform_6, window_bounds = array<i64: 32, 256>}]} {
    %c0 = arith.constant 0 : index
    %c0_0 = arith.constant 0 : index
    %0 = vector.load %arg1[%c0, %c0_0] : memref<32x256xbf16, #tpu.memory_space<vmem>>, vector<32x256xbf16>
    %1 = arith.extf %0 : vector<32x256xbf16> to vector<32x256xf32>
    %c0_1 = arith.constant 0 : index
    %c0_2 = arith.constant 0 : index
    %2 = vector.load %arg2[%c0_1, %c0_2] : memref<32x256xbf16, #tpu.memory_space<vmem>>, vector<32x256xbf16>
    %3 = arith.extf %2 : vector<32x256xbf16> to vector<32x256xf32>
    %4 = arith.addf %1, %3 : vector<32x256xf32>
    %cst = arith.constant 0.000000e+00 : f32
    %5 = vector.broadcast %cst : f32 to vector<32x256xf32>
    %6 = arith.minimumf %4, %5 : vector<32x256xf32>
    %7 = math.exp %6 : vector<32x256xf32>
    %cst_3 = arith.constant 1.000000e+00 : f32
    %8 = vector.broadcast %cst_3 : f32 to vector<32x256xf32>
    %9 = arith.subf %7, %8 : vector<32x256xf32>
    %cst_4 = arith.constant 1.67326319 : f32
    %10 = vector.broadcast %cst_4 : f32 to vector<32x256xf32>
    %11 = arith.mulf %10, %9 : vector<32x256xf32>
    %cst_5 = arith.constant 0.000000e+00 : f32
    %12 = vector.broadcast %cst_5 : f32 to vector<32x256xf32>
    %13 = arith.cmpf ogt, %4, %12 : vector<32x256xf32>
    %14 = arith.select %13, %4, %11 : vector<32x256xi1>, vector<32x256xf32>
    %cst_6 = arith.constant 1.05070102 : f32
    %15 = vector.broadcast %cst_6 : f32 to vector<32x256xf32>
    %16 = arith.mulf %15, %14 : vector<32x256xf32>
    %17 = arith.truncf %16 : vector<32x256xf32> to vector<32x256xbf16>
    %c0_7 = arith.constant 0 : index
    %c0_8 = arith.constant 0 : index
    %18 = vector.load %arg3[%c0_7, %c0_8] : memref<256x256xbf16, #tpu.memory_space<vmem>>, vector<256x256xbf16>
    %cst_9 = arith.constant dense<0.000000e+00> : vector<32x256xf32>
    %19 = tpu.matmul %17, %18, %cst_9 {dimension_numbers = #tpu.dot_dimension_numbers<[1], [0], [0], [1], [0, 0, 1, 1], [], []>} : vector<32x256xbf16>, vector<256x256xbf16>, vector<32x256xf32> -> vector<32x256xf32>
    %c0_10 = arith.constant 0 : index
    %c0_11 = arith.constant 0 : index
    %20 = vector.load %arg4[%c0_10, %c0_11] : memref<1x256xf32, #tpu.memory_space<vmem>>, vector<1x256xf32>
    %21 = vector.broadcast %20 : vector<1x256xf32> to vector<32x256xf32>
    %22 = arith.addf %19, %21 : vector<32x256xf32>
    %cst_12 = arith.constant 0.000000e+00 : f32
    %23 = vector.broadcast %cst_12 : f32 to vector<32x256xf32>
    %24 = arith.minimumf %22, %23 : vector<32x256xf32>
    %25 = math.exp %24 : vector<32x256xf32>
    %cst_13 = arith.constant 1.000000e+00 : f32
    %26 = vector.broadcast %cst_13 : f32 to vector<32x256xf32>
    %27 = arith.subf %25, %26 : vector<32x256xf32>
    %cst_14 = arith.constant 1.67326319 : f32
    %28 = vector.broadcast %cst_14 : f32 to vector<32x256xf32>
    %29 = arith.mulf %28, %27 : vector<32x256xf32>
    %cst_15 = arith.constant 0.000000e+00 : f32
    %30 = vector.broadcast %cst_15 : f32 to vector<32x256xf32>
    %31 = arith.cmpf ogt, %22, %30 : vector<32x256xf32>
    %32 = arith.select %31, %22, %29 : vector<32x256xi1>, vector<32x256xf32>
    %cst_16 = arith.constant 1.05070102 : f32
    %33 = vector.broadcast %cst_16 : f32 to vector<32x256xf32>
    %34 = arith.mulf %33, %32 : vector<32x256xf32>
    %35 = arith.truncf %34 : vector<32x256xf32> to vector<32x256xbf16>
    %c0_17 = arith.constant 0 : index
    %c0_18 = arith.constant 0 : index
    %36 = vector.load %arg5[%c0_17, %c0_18] : memref<256x256xbf16, #tpu.memory_space<vmem>>, vector<256x256xbf16>
    %cst_19 = arith.constant dense<0.000000e+00> : vector<32x256xf32>
    %37 = tpu.matmul %35, %36, %cst_19 {dimension_numbers = #tpu.dot_dimension_numbers<[1], [0], [0], [1], [0, 0, 1, 1], [], []>} : vector<32x256xbf16>, vector<256x256xbf16>, vector<32x256xf32> -> vector<32x256xf32>
    %c0_20 = arith.constant 0 : index
    %c0_21 = arith.constant 0 : index
    %38 = vector.load %arg6[%c0_20, %c0_21] : memref<1x256xf32, #tpu.memory_space<vmem>>, vector<1x256xf32>
    %39 = vector.broadcast %38 : vector<1x256xf32> to vector<32x256xf32>
    %40 = arith.addf %37, %39 : vector<32x256xf32>
    %cst_22 = arith.constant 0.000000e+00 : f32
    %41 = vector.broadcast %cst_22 : f32 to vector<32x256xf32>
    %42 = arith.minimumf %40, %41 : vector<32x256xf32>
    %43 = math.exp %42 : vector<32x256xf32>
    %cst_23 = arith.constant 1.000000e+00 : f32
    %44 = vector.broadcast %cst_23 : f32 to vector<32x256xf32>
    %45 = arith.subf %43, %44 : vector<32x256xf32>
    %cst_24 = arith.constant 1.67326319 : f32
    %46 = vector.broadcast %cst_24 : f32 to vector<32x256xf32>
    %47 = arith.mulf %46, %45 : vector<32x256xf32>
    %cst_25 = arith.constant 0.000000e+00 : f32
    %48 = vector.broadcast %cst_25 : f32 to vector<32x256xf32>
    %49 = arith.cmpf ogt, %40, %48 : vector<32x256xf32>
    %50 = arith.select %49, %40, %47 : vector<32x256xi1>, vector<32x256xf32>
    %cst_26 = arith.constant 1.05070102 : f32
    %51 = vector.broadcast %cst_26 : f32 to vector<32x256xf32>
    %52 = arith.mulf %51, %50 : vector<32x256xf32>
    %c0_27 = arith.constant 0 : index
    %c0_28 = arith.constant 0 : index
    %53 = vector.load %arg7[%c0_27, %c0_28] : memref<32x256xf32, #tpu.memory_space<vmem>>, vector<32x256xf32>
    tpu.vector_store %arg7[%c0_27, %c0_28], %52 {strides = array<i32>} : memref<32x256xf32, #tpu.memory_space<vmem>>, vector<32x256xf32>,
    return
  }
  func.func @transform_0(%arg0: i32) -> (i32, i32) {
    %c0_i32 = arith.constant 0 : i32
    %c0_i32_0 = arith.constant 0 : i32
    return %arg0, %c0_i32 : i32, i32
  }
  func.func @transform_1(%arg0: i32) -> (i32, i32) {
    %c0_i32 = arith.constant 0 : i32
    %c0_i32_0 = arith.constant 0 : i32
    return %arg0, %c0_i32 : i32, i32
  }
  func.func @transform_2(%arg0: i32) -> (i32, i32) {
    %c0_i32 = arith.constant 0 : i32
    %c0_i32_0 = arith.constant 0 : i32
    %c0_i32_1 = arith.constant 0 : i32
    return %c0_i32, %c0_i32_0 : i32, i32
  }
  func.func @transform_3(%arg0: i32) -> (i32, i32) {
    %c0_i32 = arith.constant 0 : i32
    %c0_i32_0 = arith.constant 0 : i32
    %c0_i32_1 = arith.constant 0 : i32
    return %c0_i32, %c0_i32_0 : i32, i32
  }
  func.func @transform_4(%arg0: i32) -> (i32, i32) {
    %c0_i32 = arith.constant 0 : i32
    %c0_i32_0 = arith.constant 0 : i32
    %c0_i32_1 = arith.constant 0 : i32
    return %c0_i32, %c0_i32_0 : i32, i32
  }
  func.func @transform_5(%arg0: i32) -> (i32, i32) {
    %c0_i32 = arith.constant 0 : i32
    %c0_i32_0 = arith.constant 0 : i32
    %c0_i32_1 = arith.constant 0 : i32
    return %c0_i32, %c0_i32_0 : i32, i32
  }
  func.func @transform_6(%arg0: i32) -> (i32, i32) {
    %c0_i32 = arith.constant 0 : i32
    %c0_i32_0 = arith.constant 0 : i32
    return %arg0, %c0_i32 : i32, i32
  }
}

module attributes {stable_mosaic.version = 11 : i64} {
  func.func @_linear_kernel(%arg0: i32, %arg1: memref<16x384xbf16, #tpu.memory_space<vmem>>, %arg2: memref<384x512xbf16, #tpu.memory_space<vmem>>, %arg3: memref<1x512xf32, #tpu.memory_space<vmem>>, %arg4: memref<16x512xbf16, #tpu.memory_space<vmem>>) attributes {dimension_semantics = [#tpu.dimension_semantics<parallel>], iteration_bounds = array<i64: 1>, scalar_prefetch = 0 : i64, scratch_operands = 0 : i64, tpu.core_type = #tpu.core_type<tc>, window_params = [{transform_indices = @transform_0, window_bounds = array<i64: 16, 384>}, {pipeline_mode = #tpu.pipeline_mode<synchronous>, transform_indices = @transform_1, window_bounds = array<i64: 384, 512>}, {pipeline_mode = #tpu.pipeline_mode<synchronous>, transform_indices = @transform_2, window_bounds = array<i64: 1, 512>}, {transform_indices = @transform_3, window_bounds = array<i64: 16, 512>}]} {
    %c0 = arith.constant 0 : index
    %c0_0 = arith.constant 0 : index
    %0 = vector.load %arg1[%c0, %c0_0] : memref<16x384xbf16, #tpu.memory_space<vmem>>, vector<16x384xbf16>
    %c0_1 = arith.constant 0 : index
    %c0_2 = arith.constant 0 : index
    %1 = vector.load %arg2[%c0_1, %c0_2] : memref<384x512xbf16, #tpu.memory_space<vmem>>, vector<384x512xbf16>
    %cst = arith.constant dense<0.000000e+00> : vector<16x512xf32>
    %2 = tpu.matmul %0, %1, %cst {dimension_numbers = #tpu.dot_dimension_numbers<[1], [0], [0], [1], [0, 0, 1, 1], [], []>} : vector<16x384xbf16>, vector<384x512xbf16>, vector<16x512xf32> -> vector<16x512xf32>
    %c0_3 = arith.constant 0 : index
    %c0_4 = arith.constant 0 : index
    %3 = vector.load %arg3[%c0_3, %c0_4] : memref<1x512xf32, #tpu.memory_space<vmem>>, vector<1x512xf32>
    %4 = vector.broadcast %3 : vector<1x512xf32> to vector<16x512xf32>
    %5 = arith.addf %2, %4 : vector<16x512xf32>
    %6 = arith.truncf %5 : vector<16x512xf32> to vector<16x512xbf16>
    %c0_5 = arith.constant 0 : index
    %c0_6 = arith.constant 0 : index
    %7 = vector.load %arg4[%c0_5, %c0_6] : memref<16x512xbf16, #tpu.memory_space<vmem>>, vector<16x512xbf16>
    tpu.vector_store %arg4[%c0_5, %c0_6], %6 {strides = array<i32>} : memref<16x512xbf16, #tpu.memory_space<vmem>>, vector<16x512xbf16>,
    return
  }
  func.func @transform_0(%arg0: i32) -> (i32, i32) {
    %c0_i32 = arith.constant 0 : i32
    %c0_i32_0 = arith.constant 0 : i32
    return %arg0, %c0_i32 : i32, i32
  }
  func.func @transform_1(%arg0: i32) -> (i32, i32) {
    %c0_i32 = arith.constant 0 : i32
    %c0_i32_0 = arith.constant 0 : i32
    %c0_i32_1 = arith.constant 0 : i32
    return %c0_i32, %c0_i32_0 : i32, i32
  }
  func.func @transform_2(%arg0: i32) -> (i32, i32) {
    %c0_i32 = arith.constant 0 : i32
    %c0_i32_0 = arith.constant 0 : i32
    %c0_i32_1 = arith.constant 0 : i32
    return %c0_i32, %c0_i32_0 : i32, i32
  }
  func.func @transform_3(%arg0: i32) -> (i32, i32) {
    %c0_i32 = arith.constant 0 : i32
    %c0_i32_0 = arith.constant 0 : i32
    return %arg0, %c0_i32 : i32, i32
  }
}

module attributes {stable_mosaic.version = 11 : i64} {
  func.func @_readout_kernel(%arg0: memref<16x640xbf16, #tpu.memory_space<vmem>>, %arg1: memref<640x256xbf16, #tpu.memory_space<vmem>>, %arg2: memref<1x256xf32, #tpu.memory_space<vmem>>, %arg3: memref<256x128xbf16, #tpu.memory_space<vmem>>, %arg4: memref<1x128xf32, #tpu.memory_space<vmem>>, %arg5: memref<16x128xf32, #tpu.memory_space<vmem>>) attributes {dimension_semantics = [], scalar_prefetch = 0 : i64, scratch_operands = 0 : i64, tpu.core_type = #tpu.core_type<tc>} {
    %c0 = arith.constant 0 : index
    %c0_0 = arith.constant 0 : index
    %0 = vector.load %arg0[%c0, %c0_0] : memref<16x640xbf16, #tpu.memory_space<vmem>>, vector<16x640xbf16>
    %c0_1 = arith.constant 0 : index
    %c0_2 = arith.constant 0 : index
    %1 = vector.load %arg1[%c0_1, %c0_2] : memref<640x256xbf16, #tpu.memory_space<vmem>>, vector<640x256xbf16>
    %cst = arith.constant dense<0.000000e+00> : vector<16x256xf32>
    %2 = tpu.matmul %0, %1, %cst {dimension_numbers = #tpu.dot_dimension_numbers<[1], [0], [0], [1], [0, 0, 1, 1], [], []>} : vector<16x640xbf16>, vector<640x256xbf16>, vector<16x256xf32> -> vector<16x256xf32>
    %c0_3 = arith.constant 0 : index
    %c0_4 = arith.constant 0 : index
    %3 = vector.load %arg2[%c0_3, %c0_4] : memref<1x256xf32, #tpu.memory_space<vmem>>, vector<1x256xf32>
    %4 = vector.broadcast %3 : vector<1x256xf32> to vector<16x256xf32>
    %5 = arith.addf %2, %4 : vector<16x256xf32>
    %cst_5 = arith.constant 0.000000e+00 : f32
    %6 = vector.broadcast %cst_5 : f32 to vector<16x256xf32>
    %7 = arith.minimumf %5, %6 : vector<16x256xf32>
    %8 = math.exp %7 : vector<16x256xf32>
    %cst_6 = arith.constant 1.000000e+00 : f32
    %9 = vector.broadcast %cst_6 : f32 to vector<16x256xf32>
    %10 = arith.subf %8, %9 : vector<16x256xf32>
    %cst_7 = arith.constant 1.67326319 : f32
    %11 = vector.broadcast %cst_7 : f32 to vector<16x256xf32>
    %12 = arith.mulf %11, %10 : vector<16x256xf32>
    %cst_8 = arith.constant 0.000000e+00 : f32
    %13 = vector.broadcast %cst_8 : f32 to vector<16x256xf32>
    %14 = arith.cmpf ogt, %5, %13 : vector<16x256xf32>
    %15 = arith.select %14, %5, %12 : vector<16x256xi1>, vector<16x256xf32>
    %cst_9 = arith.constant 1.05070102 : f32
    %16 = vector.broadcast %cst_9 : f32 to vector<16x256xf32>
    %17 = arith.mulf %16, %15 : vector<16x256xf32>
    %18 = arith.truncf %17 : vector<16x256xf32> to vector<16x256xbf16>
    %c0_10 = arith.constant 0 : index
    %c0_11 = arith.constant 0 : index
    %19 = vector.load %arg3[%c0_10, %c0_11] : memref<256x128xbf16, #tpu.memory_space<vmem>>, vector<256x128xbf16>
    %cst_12 = arith.constant dense<0.000000e+00> : vector<16x128xf32>
    %20 = tpu.matmul %18, %19, %cst_12 {dimension_numbers = #tpu.dot_dimension_numbers<[1], [0], [0], [1], [0, 0, 1, 1], [], []>} : vector<16x256xbf16>, vector<256x128xbf16>, vector<16x128xf32> -> vector<16x128xf32>
    %c0_13 = arith.constant 0 : index
    %c0_14 = arith.constant 0 : index
    %21 = vector.load %arg4[%c0_13, %c0_14] : memref<1x128xf32, #tpu.memory_space<vmem>>, vector<1x128xf32>
    %22 = vector.broadcast %21 : vector<1x128xf32> to vector<16x128xf32>
    %23 = arith.addf %20, %22 : vector<16x128xf32>
    %c0_15 = arith.constant 0 : index
    %c0_16 = arith.constant 0 : index
    %24 = vector.load %arg5[%c0_15, %c0_16] : memref<16x128xf32, #tpu.memory_space<vmem>>, vector<16x128xf32>
    tpu.vector_store %arg5[%c0_15, %c0_16], %23 {strides = array<i32>} : memref<16x128xf32, #tpu.memory_space<vmem>>, vector<16x128xf32>,
    return
  }
}

</mosaic_0001>

<llo_original>
// kernel: fwd.7
$region0: #{fwd.7}
  #allocation0 [shape = 'u32[]', space=smem, size = 0x4, offset = 0x4, fixed_abs, tag = 'smem constant byte address 0x4 - core index']
  #allocation1 [shape = 'u32[144,128]{1,0:T(1,128)}', space=vmem, size = 0x12000, scoped, tag = 'internal scratch']
  %s0 = inlined_call_operand.vmem [shape: bf16[16,128], index: 0, kind: input, shape index: {}]
  %s1 = inlined_call_operand.vmem [shape: bf16[128,128], index: 1, kind: input, shape index: {}]
  %s2 = inlined_call_operand.vmem [shape: f32[1,128], index: 2, kind: input, shape index: {}]
  %s3 = inlined_call_operand.vmem [shape: f32[16,128], index: 3, kind: output, shape index: {}]
  %s4 = sld [smem:[#allocation0]]
  $region22: #{fwd.7} parent=0
    _
  %s6 = ssub.s32 1, %s4
  %s7 = scalar_select 0, %s6, %s4
  // Predicated region
  $region2: #{fwd.7} parent=0 // pred_check
    _
  $region3: #{fwd.7} parent=0 // pred_check_branch
    %9 = sbr.rel (0) target = $region5
  $region4: #{fwd.7} parent=0 // pred_region
    _
  $region5: #{fwd.7} parent=0 // pred_fallthru
    _
  // Predicated region
  $region6: #{fwd.7} parent=0 // pred_check
    _
  $region7: #{fwd.7} parent=0 // pred_check_branch
    %11 = sbr.rel (0) target = $region9
  $region8: #{fwd.7} parent=0 // pred_region
    _
  $region9: #{fwd.7} parent=0 // pred_fallthru
    _
  // Predicated region
  $region10: #{fwd.7} parent=0 // pred_check
    _
  $region11: #{fwd.7} parent=0 // pred_check_branch
    %13 = sbr.rel (0) target = $region13
  $region12: #{fwd.7} parent=0 // pred_region
    _
  $region13: #{fwd.7} parent=0 // pred_fallthru
    _
  %v15 = vld [vmem:[%s0] sm:$0xf]
  %v16 = vld [vmem:[%s0 + $0x4] sm:$0xf]
  %v17 = vld [vmem:[%s1] sm:$0xf]
  %v18 = vld [vmem:[%s1 + $0x4] sm:$0xf]
  %v19 = vld [vmem:[%s1 + $0x8] sm:$0xf]
  %v20 = vld [vmem:[%s1 + $0xc] sm:$0xf]
  %v21 = vld [vmem:[%s1 + $0x10] sm:$0xf]
  %v22 = vld [vmem:[%s1 + $0x14] sm:$0xf]
  %v23 = vld [vmem:[%s1 + $0x18] sm:$0xf]
  %v24 = vld [vmem:[%s1 + $0x1c] sm:$0xf]
  %v25 = vld [vmem:[%s1 + $0x20] sm:$0xf]
  %v26 = vld [vmem:[%s1 + $0x24] sm:$0xf]
  %v27 = vld [vmem:[%s1 + $0x28] sm:$0xf]
  %v28 = vld [vmem:[%s1 + $0x2c] sm:$0xf]
  %v29 = vld [vmem:[%s1 + $0x30] sm:$0xf]
  %v30 = vld [vmem:[%s1 + $0x34] sm:$0xf]
  %v31 = vld [vmem:[%s1 + $0x38] sm:$0xf]
  %v32 = vld [vmem:[%s1 + $0x3c] sm:$0xf]
  %v33 = vld [vmem:[%s2] sm:$0x1]
  %v35 = vlaneseq
  %v36 = vshrl.u32 %v35, 7
  %v37 = vsub.s32 0, %v36
  %v38 = vrot.slane %v33, %v37
  %v42 = vunpack.c.l.b16 %v15
  %v43 = vunpack.c.l.b16 %v16
  %v44 = vpack.c.b16 %v43, %v42
  %v62 = vunpack.c.l.b16 %v17
  %v63 = vunpack.c.l.b16 %v18
  %v64 = vunpack.c.l.b16 %v19
  %v65 = vunpack.c.l.b16 %v20
  %v66 = vunpack.c.l.b16 %v21
  %v67 = vunpack.c.l.b16 %v22
  %v68 = vunpack.c.l.b16 %v23
  %v69 = vunpack.c.l.b16 %v24
  %v70 = vunpack.c.l.b16 %v25
  %v71 = vunpack.c.l.b16 %v26
  %v72 = vunpack.c.l.b16 %v27
  %v73 = vunpack.c.l.b16 %v28
  %v74 = vunpack.c.l.b16 %v29
  %v75 = vunpack.c.l.b16 %v30
  %v76 = vunpack.c.l.b16 %v31
  %v77 = vunpack.c.l.b16 %v32
  %v78 = vpack.c.b16 %v63, %v62
  %v79 = vpack.c.b16 %v65, %v64
  %v80 = vpack.c.b16 %v67, %v66
  %v81 = vpack.c.b16 %v69, %v68
  %v82 = vpack.c.b16 %v71, %v70
  %v83 = vpack.c.b16 %v73, %v72
  %v84 = vpack.c.b16 %v75, %v74
  %v85 = vpack.c.b16 %v77, %v76
  %94 = vmatprep.subr.bf16.mxu0 0
  %95 = vmatpush1.bf16.msra.mxu0 %v85
  %96 = vmatprep.subr.bf16.mxu0 0
  %97 = vmatpush1.bf16.msra.mxu0 %v84
  %98 = vmatprep.subr.bf16.mxu0 0
  %99 = vmatpush1.bf16.msra.mxu0 %v83
  %100 = vmatprep.subr.bf16.mxu0 0
  %101 = vmatpush1.bf16.msra.mxu0 %v82
  %102 = vmatprep.subr.bf16.mxu0 0
  %103 = vmatpush1.bf16.msra.mxu0 %v81
  %104 = vmatprep.subr.bf16.mxu0 0
  %105 = vmatpush1.bf16.msra.mxu0 %v80
  %106 = vmatprep.subr.bf16.mxu0 0
  %107 = vmatpush1.bf16.msra.mxu0 %v79
  %108 = vmatprep.subr.bf16.mxu0 0
  %109 = vmatpush1.bf16.msra.mxu0 %v78
  %110 = vmatprep.subr.bf16.mxu0 0
  %111 = vmatpush2.bf16.msra.mxu0 0
  %112 = vmatprep.subr.bf16.mxu0 0
  %113 = vmatpush2.bf16.msra.mxu0 0
  %114 = vmatprep.subr.bf16.mxu0 0
  %115 = vmatpush2.bf16.msra.mxu0 0
  %116 = vmatprep.subr.bf16.mxu0 0
  %117 = vmatpush2.bf16.msra.mxu0 0
  %118 = vmatprep.subr.bf16.mxu0 0
  %119 = vmatpush2.bf16.msra.mxu0 0
  %120 = vmatprep.subr.bf16.mxu0 0
  %121 = vmatpush2.bf16.msra.mxu0 0
  %122 = vmatprep.subr.bf16.mxu0 0
  %123 = vmatpush2.bf16.msra.mxu0 0
  %124 = vmatprep.subr.bf16.mxu0 0
  %125 = vmatpush2.bf16.msra.mxu0 0
  %126 = vmatprep.mubr.bf16.mxu0 0
  %127 = vmatmul.mubr.bf16.gmra.mxu0 %v44
  %v128 = vpop.f32.mrf.mxu0
  %v129 = vadd.f32 %v38, %v128
  %v130 = vpop.f32.mrf.mxu0
  %v131 = vpop.f32.mrf.mxu0
  %v132 = vadd.f32 %v38, %v131
  %v133 = vpop.f32.mrf.mxu0
  %134 = vdwg.mxu0
  %135 = vst [vmem:[%s3] sm:$0xff] %v129
  %136 = vst [vmem:[%s3 + $0x8] sm:$0xff] %v132
  // Predicated region
  $region14: #{fwd.7} parent=0 // pred_check
    _
  $region15: #{fwd.7} parent=0 // pred_check_branch
    %138 = sbr.rel (0) target = $region17
  $region16: #{fwd.7} parent=0 // pred_region
    _
  $region17: #{fwd.7} parent=0 // pred_fallthru
    _
  // Predicated region
  $region18: #{fwd.7} parent=0 // pred_check
    _
  $region19: #{fwd.7} parent=0 // pred_check_branch
    %140 = sbr.rel (0) target = $region21
  $region20: #{fwd.7} parent=0 // pred_region
    _
  $region21: #{fwd.7} parent=0 // pred_fallthru
    _

// kernel: fwd.9
$region0: #{fwd.9}
  #allocation0 [shape = 'u32[]', space=smem, size = 0x4, offset = 0x4, fixed_abs, tag = 'smem constant byte address 0x4 - core index']
  #allocation1 [shape = 'u32[144,128]{1,0:T(1,128)}', space=vmem, size = 0x12000, scoped, tag = 'internal scratch']
  %s0 = inlined_call_operand.vmem [shape: bf16[16,128], index: 0, kind: input, shape index: {}]
  %s1 = inlined_call_operand.vmem [shape: bf16[128,512], index: 1, kind: input, shape index: {}]
  %s2 = inlined_call_operand.vmem [shape: f32[1,512], index: 2, kind: input, shape index: {}]
  %s3 = inlined_call_operand.vmem [shape: bf16[16,512], index: 3, kind: output, shape index: {}]
  %s4 = sld [smem:[#allocation0]]
  $region22: #{fwd.9} parent=0
    _
  %s6 = ssub.s32 1, %s4
  %s7 = scalar_select 0, %s6, %s4
  // Predicated region
  $region2: #{fwd.9} parent=0 // pred_check
    _
  $region3: #{fwd.9} parent=0 // pred_check_branch
    %9 = sbr.rel (0) target = $region5
  $region4: #{fwd.9} parent=0 // pred_region
    _
  $region5: #{fwd.9} parent=0 // pred_fallthru
    _
  // Predicated region
  $region6: #{fwd.9} parent=0 // pred_check
    _
  $region7: #{fwd.9} parent=0 // pred_check_branch
    %11 = sbr.rel (0) target = $region9
  $region8: #{fwd.9} parent=0 // pred_region
    _
  $region9: #{fwd.9} parent=0 // pred_fallthru
    _
  // Predicated region
  $region10: #{fwd.9} parent=0 // pred_check
    _
  $region11: #{fwd.9} parent=0 // pred_check_branch
    %13 = sbr.rel (0) target = $region13
  $region12: #{fwd.9} parent=0 // pred_region
    _
  $region13: #{fwd.9} parent=0 // pred_fallthru
    _
  %v15 = vld [vmem:[%s0] sm:$0xf]
  %v16 = vld [vmem:[%s0 + $0x4] sm:$0xf]
  %v17 = vld [vmem:[%s1] sm:$0xff]
  %v18 = vld [vmem:[%s1 + $0x8] sm:$0xff]
  %v19 = vld [vmem:[%s1 + $0x10] sm:$0xff]
  %v20 = vld [vmem:[%s1 + $0x18] sm:$0xff]
  %v21 = vld [vmem:[%s1 + $0x20] sm:$0xff]
  %v22 = vld [vmem:[%s1 + $0x28] sm:$0xff]
  %v23 = vld [vmem:[%s1 + $0x30] sm:$0xff]
  %v24 = vld [vmem:[%s1 + $0x38] sm:$0xff]
  %v25 = vld [vmem:[%s1 + $0x40] sm:$0xff]
  %v26 = vld [vmem:[%s1 + $0x48] sm:$0xff]
  %v27 = vld [vmem:[%s1 + $0x50] sm:$0xff]
  %v28 = vld [vmem:[%s1 + $0x58] sm:$0xff]
  %v29 = vld [vmem:[%s1 + $0x60] sm:$0xff]
  %v30 = vld [vmem:[%s1 + $0x68] sm:$0xff]
  %v31 = vld [vmem:[%s1 + $0x70] sm:$0xff]
  %v32 = vld [vmem:[%s1 + $0x78] sm:$0xff]
  %v33 = vld [vmem:[%s1 + $0x80] sm:$0xff]
  %v34 = vld [vmem:[%s1 + $0x88] sm:$0xff]
  %v35 = vld [vmem:[%s1 + $0x90] sm:$0xff]
  %v36 = vld [vmem:[%s1 + $0x98] sm:$0xff]
  %v37 = vld [vmem:[%s1 + $0xa0] sm:$0xff]
  %v38 = vld [vmem:[%s1 + $0xa8] sm:$0xff]
  %v39 = vld [vmem:[%s1 + $0xb0] sm:$0xff]
  %v40 = vld [vmem:[%s1 + $0xb8] sm:$0xff]
  %v41 = vld [vmem:[%s1 + $0xc0] sm:$0xff]
  %v42 = vld [vmem:[%s1 + $0xc8] sm:$0xff]
  %v43 = vld [vmem:[%s1 + $0xd0] sm:$0xff]
  %v44 = vld [vmem:[%s1 + $0xd8] sm:$0xff]
  %v45 = vld [vmem:[%s1 + $0xe0] sm:$0xff]
  %v46 = vld [vmem:[%s1 + $0xe8] sm:$0xff]
  %v47 = vld [vmem:[%s1 + $0xf0] sm:$0xff]
  %v48 = vld [vmem:[%s1 + $0xf8] sm:$0xff]
  %v49 = vld [vmem:[%s2] sm:$0xf]
  %v51 = vlaneseq
  %v52 = vshrl.u32 %v51, 7
  %v53 = vsub.s32 0, %v52
  %v54 = vrot.slane %v49, %v53
  %v55 = vlaneseq
  %v56 = vshrl.u32 %v55, 7
  %v57 = vsub.s32 1, %v56
  %v58 = vrot.slane %v49, %v57
  %v59 = vlaneseq
  %v60 = vshrl.u32 %v59, 7
  %v61 = vsub.s32 2, %v60
  %v62 = vrot.slane %v49, %v61
  %v63 = vlaneseq
  %v64 = vshrl.u32 %v63, 7
  %v65 = vsub.s32 3, %v64
  %v66 = vrot.slane %v49, %v65
  %v73 = vunpack.c.l.b16 %v15
  %v74 = vunpack.c.l.b16 %v16
  %v75 = vpack.c.b16 %v74, %v73
  %v109 = vunpack.c.l.b16 %v17
  %v110 = vunpack.c.h.b16 %v17
  %v111 = vunpack.c.l.b16 %v18
  %v112 = vunpack.c.h.b16 %v18
  %v113 = vunpack.c.l.b16 %v19
  %v114 = vunpack.c.h.b16 %v19
  %v115 = vunpack.c.l.b16 %v20
  %v116 = vunpack.c.h.b16 %v20
  %v117 = vunpack.c.l.b16 %v21
  %v118 = vunpack.c.h.b16 %v21
  %v119 = vunpack.c.l.b16 %v22
  %v120 = vunpack.c.h.b16 %v22
  %v121 = vunpack.c.l.b16 %v23
  %v122 = vunpack.c.h.b16 %v23
  %v123 = vunpack.c.l.b16 %v24
  %v124 = vunpack.c.h.b16 %v24
  %v125 = vunpack.c.l.b16 %v25
  %v126 = vunpack.c.h.b16 %v25
  %v127 = vunpack.c.l.b16 %v26
  %v128 = vunpack.c.h.b16 %v26
  %v129 = vunpack.c.l.b16 %v27
  %v130 = vunpack.c.h.b16 %v27
  %v131 = vunpack.c.l.b16 %v28
  %v132 = vunpack.c.h.b16 %v28
  %v133 = vunpack.c.l.b16 %v29
  %v134 = vunpack.c.h.b16 %v29
  %v135 = vunpack.c.l.b16 %v30
  %v136 = vunpack.c.h.b16 %v30
  %v137 = vunpack.c.l.b16 %v31
  %v138 = vunpack.c.h.b16 %v31
  %v139 = vunpack.c.l.b16 %v32
  %v140 = vunpack.c.h.b16 %v32
  %v141 = vunpack.c.l.b16 %v33
  %v142 = vunpack.c.h.b16 %v33
  %v143 = vunpack.c.l.b16 %v34
  %v144 = vunpack.c.h.b16 %v34
  %v145 = vunpack.c.l.b16 %v35
  %v146 = vunpack.c.h.b16 %v35
  %v147 = vunpack.c.l.b16 %v36
  %v148 = vunpack.c.h.b16 %v36
  %v149 = vunpack.c.l.b16 %v37
  %v150 = vunpack.c.h.b16 %v37
  %v151 = vunpack.c.l.b16 %v38
  %v152 = vunpack.c.h.b16 %v38
  %v153 = vunpack.c.l.b16 %v39
  %v154 = vunpack.c.h.b16 %v39
  %v155 = vunpack.c.l.b16 %v40
  %v156 = vunpack.c.h.b16 %v40
  %v157 = vunpack.c.l.b16 %v41
  %v158 = vunpack.c.h.b16 %v41
  %v159 = vunpack.c.l.b16 %v42
  %v160 = vunpack.c.h.b16 %v42
  %v161 = vunpack.c.l.b16 %v43
  %v162 = vunpack.c.h.b16 %v43
  %v163 = vunpack.c.l.b16 %v44
  %v164 = vunpack.c.h.b16 %v44
  %v165 = vunpack.c.l.b16 %v45
  %v166 = vunpack.c.h.b16 %v45
  %v167 = vunpack.c.l.b16 %v46
  %v168 = vunpack.c.h.b16 %v46
  %v169 = vunpack.c.l.b16 %v47
  %v170 = vunpack.c.h.b16 %v47
  %v171 = vunpack.c.l.b16 %v48
  %v172 = vunpack.c.h.b16 %v48
  %v173 = vpack.c.b16 %v113, %v109
  %v174 = vpack.c.b16 %v114, %v110
  %v175 = vpack.c.b16 %v115, %v111
  %v176 = vpack.c.b16 %v116, %v112
  %v177 = vpack.c.b16 %v121, %v117
  %v178 = vpack.c.b16 %v122, %v118
  %v179 = vpack.c.b16 %v123, %v119
  %v180 = vpack.c.b16 %v124, %v120
  %v181 = vpack.c.b16 %v129, %v125
  %v182 = vpack.c.b16 %v130, %v126
  %v183 = vpack.c.b16 %v131, %v127
  %v184 = vpack.c.b16 %v132, %v128
  %v185 = vpack.c.b16 %v137, %v133
  %v186 = vpack.c.b16 %v138, %v134
  %v187 = vpack.c.b16 %v139, %v135
  %v188 = vpack.c.b16 %v140, %v136
  %v189 = vpack.c.b16 %v145, %v141
  %v190 = vpack.c.b16 %v146, %v142
  %v191 = vpack.c.b16 %v147, %v143
  %v192 = vpack.c.b16 %v148, %v144
  %v193 = vpack.c.b16 %v153, %v149
  %v194 = vpack.c.b16 %v154, %v150
  %v195 = vpack.c.b16 %v155, %v151
  %v196 = vpack.c.b16 %v156, %v152
  %v197 = vpack.c.b16 %v161, %v157
  %v198 = vpack.c.b16 %v162, %v158
  %v199 = vpack.c.b16 %v163, %v159
  %v200 = vpack.c.b16 %v164, %v160
  %v201 = vpack.c.b16 %v169, %v165
  %v202 = vpack.c.b16 %v170, %v166
  %v203 = vpack.c.b16 %v171, %v167
  %v204 = vpack.c.b16 %v172, %v168
  %237 = vmatprep.subr.bf16.mxu0 %v202
  %238 = vmatpush1.bf16.msra.mxu0 %v201
  %239 = vmatprep.subr.bf16.mxu0 %v198
  %240 = vmatpush1.bf16.msra.mxu0 %v197
  %241 = vmatprep.subr.bf16.mxu0 %v194
  %242 = vmatpush1.bf16.msra.mxu0 %v193
  %243 = vmatprep.subr.bf16.mxu0 %v190
  %244 = vmatpush1.bf16.msra.mxu0 %v189
  %245 = vmatprep.subr.bf16.mxu0 %v186
  %246 = vmatpush1.bf16.msra.mxu0 %v185
  %247 = vmatprep.subr.bf16.mxu0 %v182
  %248 = vmatpush1.bf16.msra.mxu0 %v181
  %249 = vmatprep.subr.bf16.mxu0 %v178
  %250 = vmatpush1.bf16.msra.mxu0 %v177
  %251 = vmatprep.subr.bf16.mxu0 %v174
  %252 = vmatpush1.bf16.msra.mxu0 %v173
  %253 = vmatprep.subr.bf16.mxu0 0
  %254 = vmatpush2.bf16.msra.mxu0 0
  %255 = vmatprep.subr.bf16.mxu0 0
  %256 = vmatpush2.bf16.msra.mxu0 0
  %257 = vmatprep.subr.bf16.mxu0 0
  %258 = vmatpush2.bf16.msra.mxu0 0
  %259 = vmatprep.subr.bf16.mxu0 0
  %260 = vmatpush2.bf16.msra.mxu0 0
  %261 = vmatprep.subr.bf16.mxu0 0
  %262 = vmatpush2.bf16.msra.mxu0 0
  %263 = vmatprep.subr.bf16.mxu0 0
  %264 = vmatpush2.bf16.msra.mxu0 0
  %265 = vmatprep.subr.bf16.mxu0 0
  %266 = vmatpush2.bf16.msra.mxu0 0
  %267 = vmatprep.subr.bf16.mxu0 0
  %268 = vmatpush2.bf16.msra.mxu0 0
  %269 = vmatprep.mubr.bf16.mxu0 0
  %270 = vmatmul.mubr.bf16.gmra.mxu0 %v75
  %v271 = vpop.f32.mrf.mxu0
  %v272 = vadd.f32 %v54, %v271
  %v273 = vpop.f32.mrf.mxu0
  %v274 = vadd.f32 %v58, %v273
  %v275 = vpop.f32.mrf.mxu0
  %v276 = vadd.f32 %v54, %v275
  %v277 = vpop.f32.mrf.mxu0
  %v278 = vadd.f32 %v58, %v277
  %279 = vdwg.mxu0
  %280 = vmatprep.subr.bf16.mxu0 %v204
  %281 = vmatpush1.bf16.msra.mxu0 %v203
  %282 = vmatprep.subr.bf16.mxu0 %v200
  %283 = vmatpush1.bf16.msra.mxu0 %v199
  %284 = vmatprep.subr.bf16.mxu0 %v196
  %285 = vmatpush1.bf16.msra.mxu0 %v195
  %286 = vmatprep.subr.bf16.mxu0 %v192
  %287 = vmatpush1.bf16.msra.mxu0 %v191
  %288 = vmatprep.subr.bf16.mxu0 %v188
  %289 = vmatpush1.bf16.msra.mxu0 %v187
  %290 = vmatprep.subr.bf16.mxu0 %v184
  %291 = vmatpush1.bf16.msra.mxu0 %v183
  %292 = vmatprep.subr.bf16.mxu0 %v180
  %293 = vmatpush1.bf16.msra.mxu0 %v179
  %294 = vmatprep.subr.bf16.mxu0 %v176
  %295 = vmatpush1.bf16.msra.mxu0 %v175
  %296 = vmatprep.subr.bf16.mxu0 0
  %297 = vmatpush2.bf16.msra.mxu0 0
  %298 = vmatprep.subr.bf16.mxu0 0
  %299 = vmatpush2.bf16.msra.mxu0 0
  %300 = vmatprep.subr.bf16.mxu0 0
  %301 = vmatpush2.bf16.msra.mxu0 0
  %302 = vmatprep.subr.bf16.mxu0 0
  %303 = vmatpush2.bf16.msra.mxu0 0
  %304 = vmatprep.subr.bf16.mxu0 0
  %305 = vmatpush2.bf16.msra.mxu0 0
  %306 = vmatprep.subr.bf16.mxu0 0
  %307 = vmatpush2.bf16.msra.mxu0 0
  %308 = vmatprep.subr.bf16.mxu0 0
  %309 = vmatpush2.bf16.msra.mxu0 0
  %310 = vmatprep.subr.bf16.mxu0 0
  %311 = vmatpush2.bf16.msra.mxu0 0
  %312 = vmatprep.mubr.bf16.mxu0 0
  %313 = vmatmul.mubr.bf16.gmra.mxu0 %v75
  %v314 = vpop.f32.mrf.mxu0
  %v315 = vadd.f32 %v62, %v314
  %v316 = vpop.f32.mrf.mxu0
  %v317 = vadd.f32 %v66, %v316
  %v318 = vpop.f32.mrf.mxu0
  %v319 = vadd.f32 %v62, %v318
  %v320 = vpop.f32.mrf.mxu0
  %v321 = vadd.f32 %v66, %v320
  %322 = vdwg.mxu0
  %v323 = vpack.c.bf16 %v276, %v272
  %v324 = vpack.c.bf16 %v278, %v274
  %v325 = vpack.c.bf16 %v319, %v315
  %v326 = vpack.c.bf16 %v321, %v317
  %v331 = vunpack.c.l.b16 %v323
  %v332 = vunpack.c.l.b16 %v324
  %v333 = vunpack.c.l.b16 %v325
  %v334 = vunpack.c.l.b16 %v326
  %v335 = vunpack.c.h.b16 %v323
  %v336 = vunpack.c.h.b16 %v324
  %v337 = vunpack.c.h.b16 %v325
  %v338 = vunpack.c.h.b16 %v326
  %v339 = vpack.c.b16 %v332, %v331
  %v340 = vpack.c.b16 %v334, %v333
  %v341 = vpack.c.b16 %v336, %v335
  %v342 = vpack.c.b16 %v338, %v337
  %347 = vst [vmem:[%s3] sm:$0xff] %v339
  %348 = vst [vmem:[%s3 + $0x8] sm:$0xff] %v340
  %349 = vst [vmem:[%s3 + $0x10] sm:$0xff] %v341
  %350 = vst [vmem:[%s3 + $0x18] sm:$0xff] %v342
  // Predicated region
  $region14: #{fwd.9} parent=0 // pred_check
    _
  $region15: #{fwd.9} parent=0 // pred_check_branch
    %352 = sbr.rel (0) target = $region17
  $region16: #{fwd.9} parent=0 // pred_region
    _
  $region17: #{fwd.9} parent=0 // pred_fallthru
    _
  // Predicated region
  $region18: #{fwd.9} parent=0 // pred_check
    _
  $region19: #{fwd.9} parent=0 // pred_check_branch
    %354 = sbr.rel (0) target = $region21
  $region20: #{fwd.9} parent=0 // pred_region
    _
  $region21: #{fwd.9} parent=0 // pred_fallthru
    _

// kernel: fwd.10
$region0: #{fwd.10}
  #allocation0 [shape = 'u32[]', space=smem, size = 0x4, offset = 0x4, fixed_abs, tag = 'smem constant byte address 0x4 - core index']
  #allocation1 [shape = 'u32[144,128]{1,0:T(1,128)}', space=vmem, size = 0x12000, scoped, tag = 'internal scratch']
  %s0 = inlined_call_operand.vmem [shape: bf16[32,256], index: 0, kind: input, shape index: {}]
  %s1 = inlined_call_operand.vmem [shape: bf16[32,256], index: 1, kind: input, shape index: {}]
  %s2 = inlined_call_operand.vmem [shape: bf16[256,256], index: 2, kind: input, shape index: {}]
  %s3 = inlined_call_operand.vmem [shape: f32[1,256], index: 3, kind: input, shape index: {}]
  %s4 = inlined_call_operand.vmem [shape: bf16[256,256], index: 4, kind: input, shape index: {}]
  %s5 = inlined_call_operand.vmem [shape: f32[1,256], index: 5, kind: input, shape index: {}]
  %s6 = inlined_call_operand.vmem [shape: f32[32,256], index: 6, kind: output, shape index: {}]
  %s7 = sld [smem:[#allocation0]]
  $region34: #{fwd.10} parent=0
    _
  %s9 = ssub.s32 1, %s7
  %s10 = scalar_select 0, %s9, %s7
  // Predicated region
  $region2: #{fwd.10} parent=0 // pred_check
    _
  $region3: #{fwd.10} parent=0 // pred_check_branch
    %12 = sbr.rel (0) target = $region5
  $region4: #{fwd.10} parent=0 // pred_region
    _
  $region5: #{fwd.10} parent=0 // pred_fallthru
    _
  // Predicated region
  $region6: #{fwd.10} parent=0 // pred_check
    _
  $region7: #{fwd.10} parent=0 // pred_check_branch
    %14 = sbr.rel (0) target = $region9
  $region8: #{fwd.10} parent=0 // pred_region
    _
  $region9: #{fwd.10} parent=0 // pred_fallthru
    _
  // Predicated region
  $region10: #{fwd.10} parent=0 // pred_check
    _
  $region11: #{fwd.10} parent=0 // pred_check_branch
    %16 = sbr.rel (0) target = $region13
  $region12: #{fwd.10} parent=0 // pred_region
    _
  $region13: #{fwd.10} parent=0 // pred_fallthru
    _
  // Predicated region
  $region14: #{fwd.10} parent=0 // pred_check
    _
  $region15: #{fwd.10} parent=0 // pred_check_branch
    %18 = sbr.rel (0) target = $region17
  $region16: #{fwd.10} parent=0 // pred_region
    _
  $region17: #{fwd.10} parent=0 // pred_fallthru
    _
  // Predicated region
  $region18: #{fwd.10} parent=0 // pred_check
    _
  $region19: #{fwd.10} parent=0 // pred_check_branch
    %20 = sbr.rel (0) target = $region21
  $region20: #{fwd.10} parent=0 // pred_region
    _
  $region21: #{fwd.10} parent=0 // pred_fallthru
    _
  // Predicated region
  $region22: #{fwd.10} parent=0 // pred_check
    _
  $region23: #{fwd.10} parent=0 // pred_check_branch
    %22 = sbr.rel (0) target = $region25
  $region24: #{fwd.10} parent=0 // pred_region
    _
  $region25: #{fwd.10} parent=0 // pred_fallthru
    _
  %v23 = vld [vmem:[%s0] sm:$0xff]
  %v24 = vld [vmem:[%s0 + $0x8] sm:$0xff]
  %v25 = vld [vmem:[%s0 + $0x10] sm:$0xff]
  %v26 = vld [vmem:[%s0 + $0x18] sm:$0xff]
  %v27 = vunpack.c.l.bf16 %v23
  %v28 = vunpack.c.h.bf16 %v23
  %v29 = vunpack.c.l.bf16 %v24
  %v30 = vunpack.c.h.bf16 %v24
  %v31 = vunpack.c.l.bf16 %v25
  %v32 = vunpack.c.h.bf16 %v25
  %v33 = vunpack.c.l.bf16 %v26
  %v34 = vunpack.c.h.bf16 %v26
  %v35 = vld [vmem:[%s1] sm:$0xff]
  %v36 = vld [vmem:[%s1 + $0x8] sm:$0xff]
  %v37 = vld [vmem:[%s1 + $0x10] sm:$0xff]
  %v38 = vld [vmem:[%s1 + $0x18] sm:$0xff]
  %v39 = vunpack.c.l.bf16 %v35
  %v40 = vunpack.c.h.bf16 %v35
  %v41 = vunpack.c.l.bf16 %v36
  %v42 = vunpack.c.h.bf16 %v36
  %v43 = vunpack.c.l.bf16 %v37
  %v44 = vunpack.c.h.bf16 %v37
  %v45 = vunpack.c.l.bf16 %v38
  %v46 = vunpack.c.h.bf16 %v38
  %v47 = vadd.f32 %v27, %v39
  %v48 = vadd.f32 %v28, %v40
  %v49 = vadd.f32 %v29, %v41
  %v50 = vadd.f32 %v30, %v42
  %v51 = vadd.f32 %v31, %v43
  %v52 = vadd.f32 %v32, %v44
  %v53 = vadd.f32 %v33, %v45
  %v54 = vadd.f32 %v34, %v46
  %v55 = vmin.f32 %v47, 0.0
  %v56 = vmin.f32 %v48, 0.0
  %v57 = vmin.f32 %v49, 0.0
  %v58 = vmin.f32 %v50, 0.0
  %v59 = vmin.f32 %v51, 0.0
  %v60 = vmin.f32 %v52, 0.0
  %v61 = vmin.f32 %v53, 0.0
  %v62 = vmin.f32 %v54, 0.0
  %v63 = vmul.f32 %v55, 1.442695
  %v64 = vpow.pop %v63
  %v65 = vmul.f32 %v56, 1.442695
  %v66 = vpow.pop %v65
  %v67 = vmul.f32 %v57, 1.442695
  %v68 = vpow.pop %v67
  %v69 = vmul.f32 %v58, 1.442695
  %v70 = vpow.pop %v69
  %v71 = vmul.f32 %v59, 1.442695
  %v72 = vpow.pop %v71
  %v73 = vmul.f32 %v60, 1.442695
  %v74 = vpow.pop %v73
  %v75 = vmul.f32 %v61, 1.442695
  %v76 = vpow.pop %v75
  %v77 = vmul.f32 %v62, 1.442695
  %v78 = vpow.pop %v77
  %v79 = vsub.f32 %v64, 1.0
  %v80 = vsub.f32 %v66, 1.0
  %v81 = vsub.f32 %v68, 1.0
  %v82 = vsub.f32 %v70, 1.0
  %v83 = vsub.f32 %v72, 1.0
  %v84 = vsub.f32 %v74, 1.0
  %v85 = vsub.f32 %v76, 1.0
  %v86 = vsub.f32 %v78, 1.0
  %v87 = vmul.f32 %v79, 1.6732632
  %v88 = vmul.f32 %v80, 1.6732632
  %v89 = vmul.f32 %v81, 1.6732632
  %v90 = vmul.f32 %v82, 1.6732632
  %v91 = vmul.f32 %v83, 1.6732632
  %v92 = vmul.f32 %v84, 1.6732632
  %v93 = vmul.f32 %v85, 1.6732632
  %v94 = vmul.f32 %v86, 1.6732632
  %vm95 = vcmp.gt.f32.partialorder %v47, 0.0
  %vm96 = vcmp.gt.f32.partialorder %v48, 0.0
  %vm97 = vcmp.gt.f32.partialorder %v49, 0.0
  %vm98 = vcmp.gt.f32.partialorder %v50, 0.0
  %vm99 = vcmp.gt.f32.partialorder %v51, 0.0
  %vm100 = vcmp.gt.f32.partialorder %v52, 0.0
  %vm101 = vcmp.gt.f32.partialorder %v53, 0.0
  %vm102 = vcmp.gt.f32.partialorder %v54, 0.0
  %v103 = vsel %vm95, %v47, %v87
  %v104 = vsel %vm96, %v48, %v88
  %v105 = vsel %vm97, %v49, %v89
  %v106 = vsel %vm98, %v50, %v90
  %v107 = vsel %vm99, %v51, %v91
  %v108 = vsel %vm100, %v52, %v92
  %v109 = vsel %vm101, %v53, %v93
  %v110 = vsel %vm102, %v54, %v94
  %v111 = vmul.f32 %v103, 1.050701
  %v112 = vmul.f32 %v104, 1.050701
  %v113 = vmul.f32 %v105, 1.050701
  %v114 = vmul.f32 %v106, 1.050701
  %v115 = vmul.f32 %v107, 1.050701
  %v116 = vmul.f32 %v108, 1.050701
  %v117 = vmul.f32 %v109, 1.050701
  %v118 = vmul.f32 %v110, 1.050701
  %v119 = vpack.c.bf16 %v113, %v111
  %v120 = vpack.c.bf16 %v114, %v112
  %v121 = vpack.c.bf16 %v117, %v115
  %v122 = vpack.c.bf16 %v118, %v116
  %v123 = vld [vmem:[%s2] sm:$0xff]
  %v124 = vld [vmem:[%s2 + $0x8] sm:$0xff]
  %v125 = vld [vmem:[%s2 + $0x10] sm:$0xff]
  %v126 = vld [vmem:[%s2 + $0x18] sm:$0xff]
  %v127 = vld [vmem:[%s2 + $0x20] sm:$0xff]
  %v128 = vld [vmem:[%s2 + $0x28] sm:$0xff]
  %v129 = vld [vmem:[%s2 + $0x30] sm:$0xff]
  %v130 = vld [vmem:[%s2 + $0x38] sm:$0xff]
  %v131 = vld [vmem:[%s2 + $0x40] sm:$0xff]
  %v132 = vld [vmem:[%s2 + $0x48] sm:$0xff]
  %v133 = vld [vmem:[%s2 + $0x50] sm:$0xff]
  %v134 = vld [vmem:[%s2 + $0x58] sm:$0xff]
  %v135 = vld [vmem:[%s2 + $0x60] sm:$0xff]
  %v136 = vld [vmem:[%s2 + $0x68] sm:$0xff]
  %v137 = vld [vmem:[%s2 + $0x70] sm:$0xff]
  %v138 = vld [vmem:[%s2 + $0x78] sm:$0xff]
  %v139 = vld [vmem:[%s2 + $0x80] sm:$0xff]
  %v140 = vld [vmem:[%s2 + $0x88] sm:$0xff]
  %v141 = vld [vmem:[%s2 + $0x90] sm:$0xff]
  %v142 = vld [vmem:[%s2 + $0x98] sm:$0xff]
  %v143 = vld [vmem:[%s2 + $0xa0] sm:$0xff]
  %v144 = vld [vmem:[%s2 + $0xa8] sm:$0xff]
  %v145 = vld [vmem:[%s2 + $0xb0] sm:$0xff]
  %v146 = vld [vmem:[%s2 + $0xb8] sm:$0xff]
  %v147 = vld [vmem:[%s2 + $0xc0] sm:$0xff]
  %v148 = vld [vmem:[%s2 + $0xc8] sm:$0xff]
  %v149 = vld [vmem:[%s2 + $0xd0] sm:$0xff]
  %v150 = vld [vmem:[%s2 + $0xd8] sm:$0xff]
  %v151 = vld [vmem:[%s2 + $0xe0] sm:$0xff]
  %v152 = vld [vmem:[%s2 + $0xe8] sm:$0xff]
  %v153 = vld [vmem:[%s2 + $0xf0] sm:$0xff]
  %v154 = vld [vmem:[%s2 + $0xf8] sm:$0xff]
  %v155 = vld [vmem:[%s3] sm:$0x3]
  %v157 = vlaneseq
  %v158 = vshrl.u32 %v157, 7
  %v159 = vsub.s32 0, %v158
  %v160 = vrot.slane %v155, %v159
  %v161 = vlaneseq
  %v162 = vshrl.u32 %v161, 7
  %v163 = vsub.s32 1, %v162
  %v164 = vrot.slane %v155, %v163
  %v199 = vunpack.c.l.b16 %v123
  %v200 = vunpack.c.h.b16 %v123
  %v201 = vunpack.c.l.b16 %v124
  %v202 = vunpack.c.h.b16 %v124
  %v203 = vunpack.c.l.b16 %v125
  %v204 = vunpack.c.h.b16 %v125
  %v205 = vunpack.c.l.b16 %v126
  %v206 = vunpack.c.h.b16 %v126
  %v207 = vunpack.c.l.b16 %v127
  %v208 = vunpack.c.h.b16 %v127
  %v209 = vunpack.c.l.b16 %v128
  %v210 = vunpack.c.h.b16 %v128
  %v211 = vunpack.c.l.b16 %v129
  %v212 = vunpack.c.h.b16 %v129
  %v213 = vunpack.c.l.b16 %v130
  %v214 = vunpack.c.h.b16 %v130
  %v215 = vunpack.c.l.b16 %v131
  %v216 = vunpack.c.h.b16 %v131
  %v217 = vunpack.c.l.b16 %v132
  %v218 = vunpack.c.h.b16 %v132
  %v219 = vunpack.c.l.b16 %v133
  %v220 = vunpack.c.h.b16 %v133
  %v221 = vunpack.c.l.b16 %v134
  %v222 = vunpack.c.h.b16 %v134
  %v223 = vunpack.c.l.b16 %v135
  %v224 = vunpack.c.h.b16 %v135
  %v225 = vunpack.c.l.b16 %v136
  %v226 = vunpack.c.h.b16 %v136
  %v227 = vunpack.c.l.b16 %v137
  %v228 = vunpack.c.h.b16 %v137
  %v229 = vunpack.c.l.b16 %v138
  %v230 = vunpack.c.h.b16 %v138
  %v231 = vunpack.c.l.b16 %v139
  %v232 = vunpack.c.h.b16 %v139
  %v233 = vunpack.c.l.b16 %v140
  %v234 = vunpack.c.h.b16 %v140
  %v235 = vunpack.c.l.b16 %v141
  %v236 = vunpack.c.h.b16 %v141
  %v237 = vunpack.c.l.b16 %v142
  %v238 = vunpack.c.h.b16 %v142
  %v239 = vunpack.c.l.b16 %v143
  %v240 = vunpack.c.h.b16 %v143
  %v241 = vunpack.c.l.b16 %v144
  %v242 = vunpack.c.h.b16 %v144
  %v243 = vunpack.c.l.b16 %v145
  %v244 = vunpack.c.h.b16 %v145
  %v245 = vunpack.c.l.b16 %v146
  %v246 = vunpack.c.h.b16 %v146
  %v247 = vunpack.c.l.b16 %v147
  %v248 = vunpack.c.h.b16 %v147
  %v249 = vunpack.c.l.b16 %v148
  %v250 = vunpack.c.h.b16 %v148
  %v251 = vunpack.c.l.b16 %v149
  %v252 = vunpack.c.h.b16 %v149
  %v253 = vunpack.c.l.b16 %v150
  %v254 = vunpack.c.h.b16 %v150
  %v255 = vunpack.c.l.b16 %v151
  %v256 = vunpack.c.h.b16 %v151
  %v257 = vunpack.c.l.b16 %v152
  %v258 = vunpack.c.h.b16 %v152
  %v259 = vunpack.c.l.b16 %v153
  %v260 = vunpack.c.h.b16 %v153
  %v261 = vunpack.c.l.b16 %v154
  %v262 = vunpack.c.h.b16 %v154
  %v263 = vpack.c.b16 %v201, %v199
  %v264 = vpack.c.b16 %v202, %v200
  %v265 = vpack.c.b16 %v205, %v203
  %v266 = vpack.c.b16 %v206, %v204
  %v267 = vpack.c.b16 %v209, %v207
  %v268 = vpack.c.b16 %v210, %v208
  %v269 = vpack.c.b16 %v213, %v211
  %v270 = vpack.c.b16 %v214, %v212
  %v271 = vpack.c.b16 %v217, %v215
  %v272 = vpack.c.b16 %v218, %v216
  %v273 = vpack.c.b16 %v221, %v219
  %v274 = vpack.c.b16 %v222, %v220
  %v275 = vpack.c.b16 %v225, %v223
  %v276 = vpack.c.b16 %v226, %v224
  %v277 = vpack.c.b16 %v229, %v227
  %v278 = vpack.c.b16 %v230, %v228
  %v279 = vpack.c.b16 %v233, %v231
  %v280 = vpack.c.b16 %v234, %v232
  %v281 = vpack.c.b16 %v237, %v235
  %v282 = vpack.c.b16 %v238, %v236
  %v283 = vpack.c.b16 %v241, %v239
  %v284 = vpack.c.b16 %v242, %v240
  %v285 = vpack.c.b16 %v245, %v243
  %v286 = vpack.c.b16 %v246, %v244
  %v287 = vpack.c.b16 %v249, %v247
  %v288 = vpack.c.b16 %v250, %v248
  %v289 = vpack.c.b16 %v253, %v251
  %v290 = vpack.c.b16 %v254, %v252
  %v291 = vpack.c.b16 %v257, %v255
  %v292 = vpack.c.b16 %v258, %v256
  %v293 = vpack.c.b16 %v261, %v259
  %v294 = vpack.c.b16 %v262, %v260
  %327 = vmatprep.subr.bf16.mxu0 %v278
  %328 = vmatpush1.bf16.msra.mxu0 %v277
  %329 = vmatprep.subr.bf16.mxu0 %v276
  %330 = vmatpush1.bf16.msra.mxu0 %v275
  %331 = vmatprep.subr.bf16.mxu0 %v274
  %332 = vmatpush1.bf16.msra.mxu0 %v273
  %333 = vmatprep.subr.bf16.mxu0 %v272
  %334 = vmatpush1.bf16.msra.mxu0 %v271
  %335 = vmatprep.subr.bf16.mxu0 %v270
  %336 = vmatpush1.bf16.msra.mxu0 %v269
  %337 = vmatprep.subr.bf16.mxu0 %v268
  %338 = vmatpush1.bf16.msra.mxu0 %v267
  %339 = vmatprep.subr.bf16.mxu0 %v266
  %340 = vmatpush1.bf16.msra.mxu0 %v265
  %341 = vmatprep.subr.bf16.mxu0 %v264
  %342 = vmatpush1.bf16.msra.mxu0 %v263
  %343 = vmatprep.subr.bf16.mxu0 %v294
  %344 = vmatpush2.bf16.msra.mxu0 %v293
  %345 = vmatprep.subr.bf16.mxu0 %v292
  %346 = vmatpush2.bf16.msra.mxu0 %v291
  %347 = vmatprep.subr.bf16.mxu0 %v290
  %348 = vmatpush2.bf16.msra.mxu0 %v289
  %349 = vmatprep.subr.bf16.mxu0 %v288
  %350 = vmatpush2.bf16.msra.mxu0 %v287
  %351 = vmatprep.subr.bf16.mxu0 %v286
  %352 = vmatpush2.bf16.msra.mxu0 %v285
  %353 = vmatprep.subr.bf16.mxu0 %v284
  %354 = vmatpush2.bf16.msra.mxu0 %v283
  %355 = vmatprep.subr.bf16.mxu0 %v282
  %356 = vmatpush2.bf16.msra.mxu0 %v281
  %357 = vmatprep.subr.bf16.mxu0 %v280
  %358 = vmatpush2.bf16.msra.mxu0 %v279
  %359 = vmatprep.mubr.bf16.mxu0 %v120
  %360 = vmatmul.mubr.bf16.gmra.mxu0 %v119
  %v361 = vpop.f32.mrf.mxu0
  %v362 = vadd.f32 %v160, %v361
  %v363 = vpop.f32.mrf.mxu0
  %v364 = vadd.f32 %v164, %v363
  %v365 = vpop.f32.mrf.mxu0
  %v366 = vadd.f32 %v160, %v365
  %v367 = vpop.f32.mrf.mxu0
  %v368 = vadd.f32 %v164, %v367
  %369 = vmatprep.mubr.bf16.mxu0 %v122
  %370 = vmatmul.mubr.bf16.gmra.mxu0 %v121
  %v371 = vpop.f32.mrf.mxu0
  %v372 = vadd.f32 %v160, %v371
  %v373 = vpop.f32.mrf.mxu0
  %v374 = vadd.f32 %v164, %v373
  %v375 = vpop.f32.mrf.mxu0
  %v376 = vadd.f32 %v160, %v375
  %v377 = vpop.f32.mrf.mxu0
  %v378 = vadd.f32 %v164, %v377
  %379 = vdwg.mxu0
  %v380 = vmin.f32 %v362, 0.0
  %v381 = vmin.f32 %v364, 0.0
  %v382 = vmin.f32 %v366, 0.0
  %v383 = vmin.f32 %v368, 0.0
  %v384 = vmin.f32 %v372, 0.0
  %v385 = vmin.f32 %v374, 0.0
  %v386 = vmin.f32 %v376, 0.0
  %v387 = vmin.f32 %v378, 0.0
  %v388 = vmul.f32 %v380, 1.442695
  %v389 = vpow.pop %v388
  %v390 = vmul.f32 %v381, 1.442695
  %v391 = vpow.pop %v390
  %v392 = vmul.f32 %v382, 1.442695
  %v393 = vpow.pop %v392
  %v394 = vmul.f32 %v383, 1.442695
  %v395 = vpow.pop %v394
  %v396 = vmul.f32 %v384, 1.442695
  %v397 = vpow.pop %v396
  %v398 = vmul.f32 %v385, 1.442695
  %v399 = vpow.pop %v398
  %v400 = vmul.f32 %v386, 1.442695
  %v401 = vpow.pop %v400
  %v402 = vmul.f32 %v387, 1.442695
  %v403 = vpow.pop %v402
  %v404 = vsub.f32 %v389, 1.0
  %v405 = vsub.f32 %v391, 1.0
  %v406 = vsub.f32 %v393, 1.0
  %v407 = vsub.f32 %v395, 1.0
  %v408 = vsub.f32 %v397, 1.0
  %v409 = vsub.f32 %v399, 1.0
  %v410 = vsub.f32 %v401, 1.0
  %v411 = vsub.f32 %v403, 1.0
  %v412 = vmul.f32 %v404, 1.6732632
  %v413 = vmul.f32 %v405, 1.6732632
  %v414 = vmul.f32 %v406, 1.6732632
  %v415 = vmul.f32 %v407, 1.6732632
  %v416 = vmul.f32 %v408, 1.6732632
  %v417 = vmul.f32 %v409, 1.6732632
  %v418 = vmul.f32 %v410, 1.6732632
  %v419 = vmul.f32 %v411, 1.6732632
  %vm420 = vcmp.gt.f32.partialorder %v362, 0.0
  %vm421 = vcmp.gt.f32.partialorder %v364, 0.0
  %vm422 = vcmp.gt.f32.partialorder %v366, 0.0
  %vm423 = vcmp.gt.f32.partialorder %v368, 0.0
  %vm424 = vcmp.gt.f32.partialorder %v372, 0.0
  %vm425 = vcmp.gt.f32.partialorder %v374, 0.0
  %vm426 = vcmp.gt.f32.partialorder %v376, 0.0
  %vm427 = vcmp.gt.f32.partialorder %v378, 0.0
  %v428 = vsel %vm420, %v362, %v412
  %v429 = vsel %vm421, %v364, %v413
  %v430 = vsel %vm422, %v366, %v414
  %v431 = vsel %vm423, %v368, %v415
  %v432 = vsel %vm424, %v372, %v416
  %v433 = vsel %vm425, %v374, %v417
  %v434 = vsel %vm426, %v376, %v418
  %v435 = vsel %vm427, %v378, %v419
  %v436 = vmul.f32 %v428, 1.050701
  %v437 = vmul.f32 %v429, 1.050701
  %v438 = vmul.f32 %v430, 1.050701
  %v439 = vmul.f32 %v431, 1.050701
  %v440 = vmul.f32 %v432, 1.050701
  %v441 = vmul.f32 %v433, 1.050701
  %v442 = vmul.f32 %v434, 1.050701
  %v443 = vmul.f32 %v435, 1.050701
  %v444 = vpack.c.bf16 %v438, %v436
  %v445 = vpack.c.bf16 %v439, %v437
  %v446 = vpack.c.bf16 %v442, %v440
  %v447 = vpack.c.bf16 %v443, %v441
  %v448 = vld [vmem:[%s4] sm:$0xff]
  %v449 = vld [vmem:[%s4 + $0x8] sm:$0xff]
  %v450 = vld [vmem:[%s4 + $0x10] sm:$0xff]
  %v451 = vld [vmem:[%s4 + $0x18] sm:$0xff]
  %v452 = vld [vmem:[%s4 + $0x20] sm:$0xff]
  %v453 = vld [vmem:[%s4 + $0x28] sm:$0xff]
  %v454 = vld [vmem:[%s4 + $0x30] sm:$0xff]
  %v455 = vld [vmem:[%s4 + $0x38] sm:$0xff]
  %v456 = vld [vmem:[%s4 + $0x40] sm:$0xff]
  %v457 = vld [vmem:[%s4 + $0x48] sm:$0xff]
  %v458 = vld [vmem:[%s4 + $0x50] sm:$0xff]
  %v459 = vld [vmem:[%s4 + $0x58] sm:$0xff]
  %v460 = vld [vmem:[%s4 + $0x60] sm:$0xff]
  %v461 = vld [vmem:[%s4 + $0x68] sm:$0xff]
  %v462 = vld [vmem:[%s4 + $0x70] sm:$0xff]
  %v463 = vld [vmem:[%s4 + $0x78] sm:$0xff]
  %v464 = vld [vmem:[%s4 + $0x80] sm:$0xff]
  %v465 = vld [vmem:[%s4 + $0x88] sm:$0xff]
  %v466 = vld [vmem:[%s4 + $0x90] sm:$0xff]
  %v467 = vld [vmem:[%s4 + $0x98] sm:$0xff]
  %v468 = vld [vmem:[%s4 + $0xa0] sm:$0xff]
  %v469 = vld [vmem:[%s4 + $0xa8] sm:$0xff]
  %v470 = vld [vmem:[%s4 + $0xb0] sm:$0xff]
  %v471 = vld [vmem:[%s4 + $0xb8] sm:$0xff]
  %v472 = vld [vmem:[%s4 + $0xc0] sm:$0xff]
  %v473 = vld [vmem:[%s4 + $0xc8] sm:$0xff]
  %v474 = vld [vmem:[%s4 + $0xd0] sm:$0xff]
  %v475 = vld [vmem:[%s4 + $0xd8] sm:$0xff]
  %v476 = vld [vmem:[%s4 + $0xe0] sm:$0xff]
  %v477 = vld [vmem:[%s4 + $0xe8] sm:$0xff]
  %v478 = vld [vmem:[%s4 + $0xf0] sm:$0xff]
  %v479 = vld [vmem:[%s4 + $0xf8] sm:$0xff]
  %v480 = vld [vmem:[%s5] sm:$0x3]
  %v482 = vlaneseq
  %v483 = vshrl.u32 %v482, 7
  %v484 = vsub.s32 0, %v483
  %v485 = vrot.slane %v480, %v484
  %v486 = vlaneseq
  %v487 = vshrl.u32 %v486, 7
  %v488 = vsub.s32 1, %v487
  %v489 = vrot.slane %v480, %v488
  %v524 = vunpack.c.l.b16 %v448
  %v525 = vunpack.c.h.b16 %v448
  %v526 = vunpack.c.l.b16 %v449
  %v527 = vunpack.c.h.b16 %v449
  %v528 = vunpack.c.l.b16 %v450
  %v529 = vunpack.c.h.b16 %v450
  %v530 = vunpack.c.l.b16 %v451
  %v531 = vunpack.c.h.b16 %v451
  %v532 = vunpack.c.l.b16 %v452
  %v533 = vunpack.c.h.b16 %v452
  %v534 = vunpack.c.l.b16 %v453
  %v535 = vunpack.c.h.b16 %v453
  %v536 = vunpack.c.l.b16 %v454
  %v537 = vunpack.c.h.b16 %v454
  %v538 = vunpack.c.l.b16 %v455
  %v539 = vunpack.c.h.b16 %v455
  %v540 = vunpack.c.l.b16 %v456
  %v541 = vunpack.c.h.b16 %v456
  %v542 = vunpack.c.l.b16 %v457
  %v543 = vunpack.c.h.b16 %v457
  %v544 = vunpack.c.l.b16 %v458
  %v545 = vunpack.c.h.b16 %v458
  %v546 = vunpack.c.l.b16 %v459
  %v547 = vunpack.c.h.b16 %v459
  %v548 = vunpack.c.l.b16 %v460
  %v549 = vunpack.c.h.b16 %v460
  %v550 = vunpack.c.l.b16 %v461
  %v551 = vunpack.c.h.b16 %v461
  %v552 = vunpack.c.l.b16 %v462
  %v553 = vunpack.c.h.b16 %v462
  %v554 = vunpack.c.l.b16 %v463
  %v555 = vunpack.c.h.b16 %v463
  %v556 = vunpack.c.l.b16 %v464
  %v557 = vunpack.c.h.b16 %v464
  %v558 = vunpack.c.l.b16 %v465
  %v559 = vunpack.c.h.b16 %v465
  %v560 = vunpack.c.l.b16 %v466
  %v561 = vunpack.c.h.b16 %v466
  %v562 = vunpack.c.l.b16 %v467
  %v563 = vunpack.c.h.b16 %v467
  %v564 = vunpack.c.l.b16 %v468
  %v565 = vunpack.c.h.b16 %v468
  %v566 = vunpack.c.l.b16 %v469
  %v567 = vunpack.c.h.b16 %v469
  %v568 = vunpack.c.l.b16 %v470
  %v569 = vunpack.c.h.b16 %v470
  %v570 = vunpack.c.l.b16 %v471
  %v571 = vunpack.c.h.b16 %v471
  %v572 = vunpack.c.l.b16 %v472
  %v573 = vunpack.c.h.b16 %v472
  %v574 = vunpack.c.l.b16 %v473
  %v575 = vunpack.c.h.b16 %v473
  %v576 = vunpack.c.l.b16 %v474
  %v577 = vunpack.c.h.b16 %v474
  %v578 = vunpack.c.l.b16 %v475
  %v579 = vunpack.c.h.b16 %v475
  %v580 = vunpack.c.l.b16 %v476
  %v581 = vunpack.c.h.b16 %v476
  %v582 = vunpack.c.l.b16 %v477
  %v583 = vunpack.c.h.b16 %v477
  %v584 = vunpack.c.l.b16 %v478
  %v585 = vunpack.c.h.b16 %v478
  %v586 = vunpack.c.l.b16 %v479
  %v587 = vunpack.c.h.b16 %v479
  %v588 = vpack.c.b16 %v526, %v524
  %v589 = vpack.c.b16 %v527, %v525
  %v590 = vpack.c.b16 %v530, %v528
  %v591 = vpack.c.b16 %v531, %v529
  %v592 = vpack.c.b16 %v534, %v532
  %v593 = vpack.c.b16 %v535, %v533
  %v594 = vpack.c.b16 %v538, %v536
  %v595 = vpack.c.b16 %v539, %v537
  %v596 = vpack.c.b16 %v542, %v540
  %v597 = vpack.c.b16 %v543, %v541
  %v598 = vpack.c.b16 %v546, %v544
  %v599 = vpack.c.b16 %v547, %v545
  %v600 = vpack.c.b16 %v550, %v548
  %v601 = vpack.c.b16 %v551, %v549
  %v602 = vpack.c.b16 %v554, %v552
  %v603 = vpack.c.b16 %v555, %v553
  %v604 = vpack.c.b16 %v558, %v556
  %v605 = vpack.c.b16 %v559, %v557
  %v606 = vpack.c.b16 %v562, %v560
  %v607 = vpack.c.b16 %v563, %v561
  %v608 = vpack.c.b16 %v566, %v564
  %v609 = vpack.c.b16 %v567, %v565
  %v610 = vpack.c.b16 %v570, %v568
  %v611 = vpack.c.b16 %v571, %v569
  %v612 = vpack.c.b16 %v574, %v572
  %v613 = vpack.c.b16 %v575, %v573
  %v614 = vpack.c.b16 %v578, %v576
  %v615 = vpack.c.b16 %v579, %v577
  %v616 = vpack.c.b16 %v582, %v580
  %v617 = vpack.c.b16 %v583, %v581
  %v618 = vpack.c.b16 %v586, %v584
  %v619 = vpack.c.b16 %v587, %v585
  %652 = vmatprep.subr.bf16.mxu0 %v603
  %653 = vmatpush1.bf16.msra.mxu0 %v602
  %654 = vmatprep.subr.bf16.mxu0 %v601
  %655 = vmatpush1.bf16.msra.mxu0 %v600
  %656 = vmatprep.subr.bf16.mxu0 %v599
  %657 = vmatpush1.bf16.msra.mxu0 %v598
  %658 = vmatprep.subr.bf16.mxu0 %v597
  %659 = vmatpush1.bf16.msra.mxu0 %v596
  %660 = vmatprep.subr.bf16.mxu0 %v595
  %661 = vmatpush1.bf16.msra.mxu0 %v594
  %662 = vmatprep.subr.bf16.mxu0 %v593
  %663 = vmatpush1.bf16.msra.mxu0 %v592
  %664 = vmatprep.subr.bf16.mxu0 %v591
  %665 = vmatpush1.bf16.msra.mxu0 %v590
  %666 = vmatprep.subr.bf16.mxu0 %v589
  %667 = vmatpush1.bf16.msra.mxu0 %v588
  %668 = vmatprep.subr.bf16.mxu0 %v619
  %669 = vmatpush2.bf16.msra.mxu0 %v618
  %670 = vmatprep.subr.bf16.mxu0 %v617
  %671 = vmatpush2.bf16.msra.mxu0 %v616
  %672 = vmatprep.subr.bf16.mxu0 %v615
  %673 = vmatpush2.bf16.msra.mxu0 %v614
  %674 = vmatprep.subr.bf16.mxu0 %v613
  %675 = vmatpush2.bf16.msra.mxu0 %v612
  %676 = vmatprep.subr.bf16.mxu0 %v611
  %677 = vmatpush2.bf16.msra.mxu0 %v610
  %678 = vmatprep.subr.bf16.mxu0 %v609
  %679 = vmatpush2.bf16.msra.mxu0 %v608
  %680 = vmatprep.subr.bf16.mxu0 %v607
  %681 = vmatpush2.bf16.msra.mxu0 %v606
  %682 = vmatprep.subr.bf16.mxu0 %v605
  %683 = vmatpush2.bf16.msra.mxu0 %v604
  %684 = vmatprep.mubr.bf16.mxu0 %v445
  %685 = vmatmul.mubr.bf16.gmra.mxu0 %v444
  %v686 = vpop.f32.mrf.mxu0
  %v687 = vadd.f32 %v485, %v686
  %v688 = vpop.f32.mrf.mxu0
  %v689 = vadd.f32 %v489, %v688
  %v690 = vpop.f32.mrf.mxu0
  %v691 = vadd.f32 %v485, %v690
  %v692 = vpop.f32.mrf.mxu0
  %v693 = vadd.f32 %v489, %v692
  %694 = vmatprep.mubr.bf16.mxu0 %v447
  %695 = vmatmul.mubr.bf16.gmra.mxu0 %v446
  %v696 = vpop.f32.mrf.mxu0
  %v697 = vadd.f32 %v485, %v696
  %v698 = vpop.f32.mrf.mxu0
  %v699 = vadd.f32 %v489, %v698
  %v700 = vpop.f32.mrf.mxu0
  %v701 = vadd.f32 %v485, %v700
  %v702 = vpop.f32.mrf.mxu0
  %v703 = vadd.f32 %v489, %v702
  %704 = vdwg.mxu0
  %v705 = vmin.f32 %v687, 0.0
  %v706 = vmin.f32 %v689, 0.0
  %v707 = vmin.f32 %v691, 0.0
  %v708 = vmin.f32 %v693, 0.0
  %v709 = vmin.f32 %v697, 0.0
  %v710 = vmin.f32 %v699, 0.0
  %v711 = vmin.f32 %v701, 0.0
  %v712 = vmin.f32 %v703, 0.0
  %v713 = vmul.f32 %v705, 1.442695
  %v714 = vpow.pop %v713
  %v715 = vmul.f32 %v706, 1.442695
  %v716 = vpow.pop %v715
  %v717 = vmul.f32 %v707, 1.442695
  %v718 = vpow.pop %v717
  %v719 = vmul.f32 %v708, 1.442695
  %v720 = vpow.pop %v719
  %v721 = vmul.f32 %v709, 1.442695
  %v722 = vpow.pop %v721
  %v723 = vmul.f32 %v710, 1.442695
  %v724 = vpow.pop %v723
  %v725 = vmul.f32 %v711, 1.442695
  %v726 = vpow.pop %v725
  %v727 = vmul.f32 %v712, 1.442695
  %v728 = vpow.pop %v727
  %v729 = vsub.f32 %v714, 1.0
  %v730 = vsub.f32 %v716, 1.0
  %v731 = vsub.f32 %v718, 1.0
  %v732 = vsub.f32 %v720, 1.0
  %v733 = vsub.f32 %v722, 1.0
  %v734 = vsub.f32 %v724, 1.0
  %v735 = vsub.f32 %v726, 1.0
  %v736 = vsub.f32 %v728, 1.0
  %v737 = vmul.f32 %v729, 1.6732632
  %v738 = vmul.f32 %v730, 1.6732632
  %v739 = vmul.f32 %v731, 1.6732632
  %v740 = vmul.f32 %v732, 1.6732632
  %v741 = vmul.f32 %v733, 1.6732632
  %v742 = vmul.f32 %v734, 1.6732632
  %v743 = vmul.f32 %v735, 1.6732632
  %v744 = vmul.f32 %v736, 1.6732632
  %vm745 = vcmp.gt.f32.partialorder %v687, 0.0
  %vm746 = vcmp.gt.f32.partialorder %v689, 0.0
  %vm747 = vcmp.gt.f32.partialorder %v691, 0.0
  %vm748 = vcmp.gt.f32.partialorder %v693, 0.0
  %vm749 = vcmp.gt.f32.partialorder %v697, 0.0
  %vm750 = vcmp.gt.f32.partialorder %v699, 0.0
  %vm751 = vcmp.gt.f32.partialorder %v701, 0.0
  %vm752 = vcmp.gt.f32.partialorder %v703, 0.0
  %v753 = vsel %vm745, %v687, %v737
  %v754 = vsel %vm746, %v689, %v738
  %v755 = vsel %vm747, %v691, %v739
  %v756 = vsel %vm748, %v693, %v740
  %v757 = vsel %vm749, %v697, %v741
  %v758 = vsel %vm750, %v699, %v742
  %v759 = vsel %vm751, %v701, %v743
  %v760 = vsel %vm752, %v703, %v744
  %v761 = vmul.f32 %v753, 1.050701
  %v762 = vmul.f32 %v754, 1.050701
  %v763 = vmul.f32 %v755, 1.050701
  %v764 = vmul.f32 %v756, 1.050701
  %v765 = vmul.f32 %v757, 1.050701
  %v766 = vmul.f32 %v758, 1.050701
  %v767 = vmul.f32 %v759, 1.050701
  %v768 = vmul.f32 %v760, 1.050701
  %769 = vst [vmem:[%s6] sm:$0xff] %v761
  %770 = vst [vmem:[%s6 + $0x8] sm:$0xff] %v762
  %771 = vst [vmem:[%s6 + $0x10] sm:$0xff] %v763
  %772 = vst [vmem:[%s6 + $0x18] sm:$0xff] %v764
  %773 = vst [vmem:[%s6 + $0x20] sm:$0xff] %v765
  %774 = vst [vmem:[%s6 + $0x28] sm:$0xff] %v766
  %775 = vst [vmem:[%s6 + $0x30] sm:$0xff] %v767
  %776 = vst [vmem:[%s6 + $0x38] sm:$0xff] %v768
  // Predicated region
  $region26: #{fwd.10} parent=0 // pred_check
    _
  $region27: #{fwd.10} parent=0 // pred_check_branch
    %778 = sbr.rel (0) target = $region29
  $region28: #{fwd.10} parent=0 // pred_region
    _
  $region29: #{fwd.10} parent=0 // pred_fallthru
    _
  // Predicated region
  $region30: #{fwd.10} parent=0 // pred_check
    _
  $region31: #{fwd.10} parent=0 // pred_check_branch
    %780 = sbr.rel (0) target = $region33
  $region32: #{fwd.10} parent=0 // pred_region
    _
  $region33: #{fwd.10} parent=0 // pred_fallthru
    _

// kernel: fwd.11
$region0: #{fwd.11}
  #allocation0 [shape = 'u32[]', space=smem, size = 0x4, offset = 0x4, fixed_abs, tag = 'smem constant byte address 0x4 - core index']
  #allocation1 [shape = 'u32[144,128]{1,0:T(1,128)}', space=vmem, size = 0x12000, scoped, tag = 'internal scratch']
  %s0 = inlined_call_operand.vmem [shape: bf16[16,384], index: 0, kind: input, shape index: {}]
  %s1 = inlined_call_operand.vmem [shape: bf16[384,512], index: 1, kind: input, shape index: {}]
  %s2 = inlined_call_operand.vmem [shape: f32[1,512], index: 2, kind: input, shape index: {}]
  %s3 = inlined_call_operand.vmem [shape: bf16[16,512], index: 3, kind: output, shape index: {}]
  %s4 = sld [smem:[#allocation0]]
  $region22: #{fwd.11} parent=0
    _
  %s6 = ssub.s32 1, %s4
  %s7 = scalar_select 0, %s6, %s4
  // Predicated region
  $region2: #{fwd.11} parent=0 // pred_check
    _
  $region3: #{fwd.11} parent=0 // pred_check_branch
    %9 = sbr.rel (0) target = $region5
  $region4: #{fwd.11} parent=0 // pred_region
    _
  $region5: #{fwd.11} parent=0 // pred_fallthru
    _
  // Predicated region
  $region6: #{fwd.11} parent=0 // pred_check
    _
  $region7: #{fwd.11} parent=0 // pred_check_branch
    %11 = sbr.rel (0) target = $region9
  $region8: #{fwd.11} parent=0 // pred_region
    _
  $region9: #{fwd.11} parent=0 // pred_fallthru
    _
  // Predicated region
  $region10: #{fwd.11} parent=0 // pred_check
    _
  $region11: #{fwd.11} parent=0 // pred_check_branch
    %13 = sbr.rel (0) target = $region13
  $region12: #{fwd.11} parent=0 // pred_region
    _
  $region13: #{fwd.11} parent=0 // pred_fallthru
    _
  %v15 = vld [vmem:[%s0] sm:$0xff]
  %v16 = vld [vmem:[%s0 + $0x8] sm:$0xf]
  %v17 = vld [vmem:[%s0 + $0xc] sm:$0xff]
  %v18 = vld [vmem:[%s0 + $0x14] sm:$0xf]
  %v19 = vld [vmem:[%s1] sm:$0xff]
  %v20 = vld [vmem:[%s1 + $0x8] sm:$0xff]
  %v21 = vld [vmem:[%s1 + $0x10] sm:$0xff]
  %v22 = vld [vmem:[%s1 + $0x18] sm:$0xff]
  %v23 = vld [vmem:[%s1 + $0x20] sm:$0xff]
  %v24 = vld [vmem:[%s1 + $0x28] sm:$0xff]
  %v25 = vld [vmem:[%s1 + $0x30] sm:$0xff]
  %v26 = vld [vmem:[%s1 + $0x38] sm:$0xff]
  %v27 = vld [vmem:[%s1 + $0x40] sm:$0xff]
  %v28 = vld [vmem:[%s1 + $0x48] sm:$0xff]
  %v29 = vld [vmem:[%s1 + $0x50] sm:$0xff]
  %v30 = vld [vmem:[%s1 + $0x58] sm:$0xff]
  %v31 = vld [vmem:[%s1 + $0x60] sm:$0xff]
  %v32 = vld [vmem:[%s1 + $0x68] sm:$0xff]
  %v33 = vld [vmem:[%s1 + $0x70] sm:$0xff]
  %v34 = vld [vmem:[%s1 + $0x78] sm:$0xff]
  %v35 = vld [vmem:[%s1 + $0x80] sm:$0xff]
  %v36 = vld [vmem:[%s1 + $0x88] sm:$0xff]
  %v37 = vld [vmem:[%s1 + $0x90] sm:$0xff]
  %v38 = vld [vmem:[%s1 + $0x98] sm:$0xff]
  %v39 = vld [vmem:[%s1 + $0xa0] sm:$0xff]
  %v40 = vld [vmem:[%s1 + $0xa8] sm:$0xff]
  %v41 = vld [vmem:[%s1 + $0xb0] sm:$0xff]
  %v42 = vld [vmem:[%s1 + $0xb8] sm:$0xff]
  %v43 = vld [vmem:[%s1 + $0xc0] sm:$0xff]
  %v44 = vld [vmem:[%s1 + $0xc8] sm:$0xff]
  %v45 = vld [vmem:[%s1 + $0xd0] sm:$0xff]
  %v46 = vld [vmem:[%s1 + $0xd8] sm:$0xff]
  %v47 = vld [vmem:[%s1 + $0xe0] sm:$0xff]
  %v48 = vld [vmem:[%s1 + $0xe8] sm:$0xff]
  %v49 = vld [vmem:[%s1 + $0xf0] sm:$0xff]
  %v50 = vld [vmem:[%s1 + $0xf8] sm:$0xff]
  %v51 = vld [vmem:[%s1 + $0x100] sm:$0xff]
  %v52 = vld [vmem:[%s1 + $0x108] sm:$0xff]
  %v53 = vld [vmem:[%s1 + $0x110] sm:$0xff]
  %v54 = vld [vmem:[%s1 + $0x118] sm:$0xff]
  %v55 = vld [vmem:[%s1 + $0x120] sm:$0xff]
  %v56 = vld [vmem:[%s1 + $0x128] sm:$0xff]
  %v57 = vld [vmem:[%s1 + $0x130] sm:$0xff]
  %v58 = vld [vmem:[%s1 + $0x138] sm:$0xff]
  %v59 = vld [vmem:[%s1 + $0x140] sm:$0xff]
  %v60 = vld [vmem:[%s1 + $0x148] sm:$0xff]
  %v61 = vld [vmem:[%s1 + $0x150] sm:$0xff]
  %v62 = vld [vmem:[%s1 + $0x158] sm:$0xff]
  %v63 = vld [vmem:[%s1 + $0x160] sm:$0xff]
  %v64 = vld [vmem:[%s1 + $0x168] sm:$0xff]
  %v65 = vld [vmem:[%s1 + $0x170] sm:$0xff]
  %v66 = vld [vmem:[%s1 + $0x178] sm:$0xff]
  %v67 = vld [vmem:[%s1 + $0x180] sm:$0xff]
  %v68 = vld [vmem:[%s1 + $0x188] sm:$0xff]
  %v69 = vld [vmem:[%s1 + $0x190] sm:$0xff]
  %v70 = vld [vmem:[%s1 + $0x198] sm:$0xff]
  %v71 = vld [vmem:[%s1 + $0x1a0] sm:$0xff]
  %v72 = vld [vmem:[%s1 + $0x1a8] sm:$0xff]
  %v73 = vld [vmem:[%s1 + $0x1b0] sm:$0xff]
  %v74 = vld [vmem:[%s1 + $0x1b8] sm:$0xff]
  %v75 = vld [vmem:[%s1 + $0x1c0] sm:$0xff]
  %v76 = vld [vmem:[%s1 + $0x1c8] sm:$0xff]
  %v77 = vld [vmem:[%s1 + $0x1d0] sm:$0xff]
  %v78 = vld [vmem:[%s1 + $0x1d8] sm:$0xff]
  %v79 = vld [vmem:[%s1 + $0x1e0] sm:$0xff]
  %v80 = vld [vmem:[%s1 + $0x1e8] sm:$0xff]
  %v81 = vld [vmem:[%s1 + $0x1f0] sm:$0xff]
  %v82 = vld [vmem:[%s1 + $0x1f8] sm:$0xff]
  %v83 = vld [vmem:[%s1 + $0x200] sm:$0xff]
  %v84 = vld [vmem:[%s1 + $0x208] sm:$0xff]
  %v85 = vld [vmem:[%s1 + $0x210] sm:$0xff]
  %v86 = vld [vmem:[%s1 + $0x218] sm:$0xff]
  %v87 = vld [vmem:[%s1 + $0x220] sm:$0xff]
  %v88 = vld [vmem:[%s1 + $0x228] sm:$0xff]
  %v89 = vld [vmem:[%s1 + $0x230] sm:$0xff]
  %v90 = vld [vmem:[%s1 + $0x238] sm:$0xff]
  %v91 = vld [vmem:[%s1 + $0x240] sm:$0xff]
  %v92 = vld [vmem:[%s1 + $0x248] sm:$0xff]
  %v93 = vld [vmem:[%s1 + $0x250] sm:$0xff]
  %v94 = vld [vmem:[%s1 + $0x258] sm:$0xff]
  %v95 = vld [vmem:[%s1 + $0x260] sm:$0xff]
  %v96 = vld [vmem:[%s1 + $0x268] sm:$0xff]
  %v97 = vld [vmem:[%s1 + $0x270] sm:$0xff]
  %v98 = vld [vmem:[%s1 + $0x278] sm:$0xff]
  %v99 = vld [vmem:[%s1 + $0x280] sm:$0xff]
  %v100 = vld [vmem:[%s1 + $0x288] sm:$0xff]
  %v101 = vld [vmem:[%s1 + $0x290] sm:$0xff]
  %v102 = vld [vmem:[%s1 + $0x298] sm:$0xff]
  %v103 = vld [vmem:[%s1 + $0x2a0] sm:$0xff]
  %v104 = vld [vmem:[%s1 + $0x2a8] sm:$0xff]
  %v105 = vld [vmem:[%s1 + $0x2b0] sm:$0xff]
  %v106 = vld [vmem:[%s1 + $0x2b8] sm:$0xff]
  %v107 = vld [vmem:[%s1 + $0x2c0] sm:$0xff]
  %v108 = vld [vmem:[%s1 + $0x2c8] sm:$0xff]
  %v109 = vld [vmem:[%s1 + $0x2d0] sm:$0xff]
  %v110 = vld [vmem:[%s1 + $0x2d8] sm:$0xff]
  %v111 = vld [vmem:[%s1 + $0x2e0] sm:$0xff]
  %v112 = vld [vmem:[%s1 + $0x2e8] sm:$0xff]
  %v113 = vld [vmem:[%s1 + $0x2f0] sm:$0xff]
  %v114 = vld [vmem:[%s1 + $0x2f8] sm:$0xff]
  %v115 = vld [vmem:[%s2] sm:$0xf]
  %v117 = vlaneseq
  %v118 = vshrl.u32 %v117, 7
  %v119 = vsub.s32 0, %v118
  %v120 = vrot.slane %v115, %v119
  %v121 = vlaneseq
  %v122 = vshrl.u32 %v121, 7
  %v123 = vsub.s32 1, %v122
  %v124 = vrot.slane %v115, %v123
  %v125 = vlaneseq
  %v126 = vshrl.u32 %v125, 7
  %v127 = vsub.s32 2, %v126
  %v128 = vrot.slane %v115, %v127
  %v129 = vlaneseq
  %v130 = vshrl.u32 %v129, 7
  %v131 = vsub.s32 3, %v130
  %v132 = vrot.slane %v115, %v131
  %v141 = vunpack.c.l.b16 %v15
  %v142 = vunpack.c.h.b16 %v15
  %v143 = vunpack.c.l.b16 %v16
  %v144 = vunpack.c.l.b16 %v17
  %v145 = vunpack.c.h.b16 %v17
  %v146 = vunpack.c.l.b16 %v18
  %v147 = vpack.c.b16 %v144, %v141
  %v148 = vpack.c.b16 %v145, %v142
  %v149 = vpack.c.b16 %v146, %v143
  %v249 = vunpack.c.l.b16 %v19
  %v250 = vunpack.c.h.b16 %v19
  %v251 = vunpack.c.l.b16 %v20
  %v252 = vunpack.c.h.b16 %v20
  %v253 = vunpack.c.l.b16 %v21
  %v254 = vunpack.c.h.b16 %v21
  %v255 = vunpack.c.l.b16 %v22
  %v256 = vunpack.c.h.b16 %v22
  %v257 = vunpack.c.l.b16 %v23
  %v258 = vunpack.c.h.b16 %v23
  %v259 = vunpack.c.l.b16 %v24
  %v260 = vunpack.c.h.b16 %v24
  %v261 = vunpack.c.l.b16 %v25
  %v262 = vunpack.c.h.b16 %v25
  %v263 = vunpack.c.l.b16 %v26
  %v264 = vunpack.c.h.b16 %v26
  %v265 = vunpack.c.l.b16 %v27
  %v266 = vunpack.c.h.b16 %v27
  %v267 = vunpack.c.l.b16 %v28
  %v268 = vunpack.c.h.b16 %v28
  %v269 = vunpack.c.l.b16 %v29
  %v270 = vunpack.c.h.b16 %v29
  %v271 = vunpack.c.l.b16 %v30
  %v272 = vunpack.c.h.b16 %v30
  %v273 = vunpack.c.l.b16 %v31
  %v274 = vunpack.c.h.b16 %v31
  %v275 = vunpack.c.l.b16 %v32
  %v276 = vunpack.c.h.b16 %v32
  %v277 = vunpack.c.l.b16 %v33
  %v278 = vunpack.c.h.b16 %v33
  %v279 = vunpack.c.l.b16 %v34
  %v280 = vunpack.c.h.b16 %v34
  %v281 = vunpack.c.l.b16 %v35
  %v282 = vunpack.c.h.b16 %v35
  %v283 = vunpack.c.l.b16 %v36
  %v284 = vunpack.c.h.b16 %v36
  %v285 = vunpack.c.l.b16 %v37
  %v286 = vunpack.c.h.b16 %v37
  %v287 = vunpack.c.l.b16 %v38
  %v288 = vunpack.c.h.b16 %v38
  %v289 = vunpack.c.l.b16 %v39
  %v290 = vunpack.c.h.b16 %v39
  %v291 = vunpack.c.l.b16 %v40
  %v292 = vunpack.c.h.b16 %v40
  %v293 = vunpack.c.l.b16 %v41
  %v294 = vunpack.c.h.b16 %v41
  %v295 = vunpack.c.l.b16 %v42
  %v296 = vunpack.c.h.b16 %v42
  %v297 = vunpack.c.l.b16 %v43
  %v298 = vunpack.c.h.b16 %v43
  %v299 = vunpack.c.l.b16 %v44
  %v300 = vunpack.c.h.b16 %v44
  %v301 = vunpack.c.l.b16 %v45
  %v302 = vunpack.c.h.b16 %v45
  %v303 = vunpack.c.l.b16 %v46
  %v304 = vunpack.c.h.b16 %v46
  %v305 = vunpack.c.l.b16 %v47
  %v306 = vunpack.c.h.b16 %v47
  %v307 = vunpack.c.l.b16 %v48
  %v308 = vunpack.c.h.b16 %v48
  %v309 = vunpack.c.l.b16 %v49
  %v310 = vunpack.c.h.b16 %v49
  %v311 = vunpack.c.l.b16 %v50
  %v312 = vunpack.c.h.b16 %v50
  %v313 = vunpack.c.l.b16 %v51
  %v314 = vunpack.c.h.b16 %v51
  %v315 = vunpack.c.l.b16 %v52
  %v316 = vunpack.c.h.b16 %v52
  %v317 = vunpack.c.l.b16 %v53
  %v318 = vunpack.c.h.b16 %v53
  %v319 = vunpack.c.l.b16 %v54
  %v320 = vunpack.c.h.b16 %v54
  %v321 = vunpack.c.l.b16 %v55
  %v322 = vunpack.c.h.b16 %v55
  %v323 = vunpack.c.l.b16 %v56
  %v324 = vunpack.c.h.b16 %v56
  %v325 = vunpack.c.l.b16 %v57
  %v326 = vunpack.c.h.b16 %v57
  %v327 = vunpack.c.l.b16 %v58
  %v328 = vunpack.c.h.b16 %v58
  %v329 = vunpack.c.l.b16 %v59
  %v330 = vunpack.c.h.b16 %v59
  %v331 = vunpack.c.l.b16 %v60
  %v332 = vunpack.c.h.b16 %v60
  %v333 = vunpack.c.l.b16 %v61
  %v334 = vunpack.c.h.b16 %v61
  %v335 = vunpack.c.l.b16 %v62
  %v336 = vunpack.c.h.b16 %v62
  %v337 = vunpack.c.l.b16 %v63
  %v338 = vunpack.c.h.b16 %v63
  %v339 = vunpack.c.l.b16 %v64
  %v340 = vunpack.c.h.b16 %v64
  %v341 = vunpack.c.l.b16 %v65
  %v342 = vunpack.c.h.b16 %v65
  %v343 = vunpack.c.l.b16 %v66
  %v344 = vunpack.c.h.b16 %v66
  %v345 = vunpack.c.l.b16 %v67
  %v346 = vunpack.c.h.b16 %v67
  %v347 = vunpack.c.l.b16 %v68
  %v348 = vunpack.c.h.b16 %v68
  %v349 = vunpack.c.l.b16 %v69
  %v350 = vunpack.c.h.b16 %v69
  %v351 = vunpack.c.l.b16 %v70
  %v352 = vunpack.c.h.b16 %v70
  %v353 = vunpack.c.l.b16 %v71
  %v354 = vunpack.c.h.b16 %v71
  %v355 = vunpack.c.l.b16 %v72
  %v356 = vunpack.c.h.b16 %v72
  %v357 = vunpack.c.l.b16 %v73
  %v358 = vunpack.c.h.b16 %v73
  %v359 = vunpack.c.l.b16 %v74
  %v360 = vunpack.c.h.b16 %v74
  %v361 = vunpack.c.l.b16 %v75
  %v362 = vunpack.c.h.b16 %v75
  %v363 = vunpack.c.l.b16 %v76
  %v364 = vunpack.c.h.b16 %v76
  %v365 = vunpack.c.l.b16 %v77
  %v366 = vunpack.c.h.b16 %v77
  %v367 = vunpack.c.l.b16 %v78
  %v368 = vunpack.c.h.b16 %v78
  %v369 = vunpack.c.l.b16 %v79
  %v370 = vunpack.c.h.b16 %v79
  %v371 = vunpack.c.l.b16 %v80
  %v372 = vunpack.c.h.b16 %v80
  %v373 = vunpack.c.l.b16 %v81
  %v374 = vunpack.c.h.b16 %v81
  %v375 = vunpack.c.l.b16 %v82
  %v376 = vunpack.c.h.b16 %v82
  %v377 = vunpack.c.l.b16 %v83
  %v378 = vunpack.c.h.b16 %v83
  %v379 = vunpack.c.l.b16 %v84
  %v380 = vunpack.c.h.b16 %v84
  %v381 = vunpack.c.l.b16 %v85
  %v382 = vunpack.c.h.b16 %v85
  %v383 = vunpack.c.l.b16 %v86
  %v384 = vunpack.c.h.b16 %v86
  %v385 = vunpack.c.l.b16 %v87
  %v386 = vunpack.c.h.b16 %v87
  %v387 = vunpack.c.l.b16 %v88
  %v388 = vunpack.c.h.b16 %v88
  %v389 = vunpack.c.l.b16 %v89
  %v390 = vunpack.c.h.b16 %v89
  %v391 = vunpack.c.l.b16 %v90
  %v392 = vunpack.c.h.b16 %v90
  %v393 = vunpack.c.l.b16 %v91
  %v394 = vunpack.c.h.b16 %v91
  %v395 = vunpack.c.l.b16 %v92
  %v396 = vunpack.c.h.b16 %v92
  %v397 = vunpack.c.l.b16 %v93
  %v398 = vunpack.c.h.b16 %v93
  %v399 = vunpack.c.l.b16 %v94
  %v400 = vunpack.c.h.b16 %v94
  %v401 = vunpack.c.l.b16 %v95
  %v402 = vunpack.c.h.b16 %v95
  %v403 = vunpack.c.l.b16 %v96
  %v404 = vunpack.c.h.b16 %v96
  %v405 = vunpack.c.l.b16 %v97
  %v406 = vunpack.c.h.b16 %v97
  %v407 = vunpack.c.l.b16 %v98
  %v408 = vunpack.c.h.b16 %v98
  %v409 = vunpack.c.l.b16 %v99
  %v410 = vunpack.c.h.b16 %v99
  %v411 = vunpack.c.l.b16 %v100
  %v412 = vunpack.c.h.b16 %v100
  %v413 = vunpack.c.l.b16 %v101
  %v414 = vunpack.c.h.b16 %v101
  %v415 = vunpack.c.l.b16 %v102
  %v416 = vunpack.c.h.b16 %v102
  %v417 = vunpack.c.l.b16 %v103
  %v418 = vunpack.c.h.b16 %v103
  %v419 = vunpack.c.l.b16 %v104
  %v420 = vunpack.c.h.b16 %v104
  %v421 = vunpack.c.l.b16 %v105
  %v422 = vunpack.c.h.b16 %v105
  %v423 = vunpack.c.l.b16 %v106
  %v424 = vunpack.c.h.b16 %v106
  %v425 = vunpack.c.l.b16 %v107
  %v426 = vunpack.c.h.b16 %v107
  %v427 = vunpack.c.l.b16 %v108
  %v428 = vunpack.c.h.b16 %v108
  %v429 = vunpack.c.l.b16 %v109
  %v430 = vunpack.c.h.b16 %v109
  %v431 = vunpack.c.l.b16 %v110
  %v432 = vunpack.c.h.b16 %v110
  %v433 = vunpack.c.l.b16 %v111
  %v434 = vunpack.c.h.b16 %v111
  %v435 = vunpack.c.l.b16 %v112
  %v436 = vunpack.c.h.b16 %v112
  %v437 = vunpack.c.l.b16 %v113
  %v438 = vunpack.c.h.b16 %v113
  %v439 = vunpack.c.l.b16 %v114
  %v440 = vunpack.c.h.b16 %v114
  %v441 = vpack.c.b16 %v253, %v249
  %v442 = vpack.c.b16 %v254, %v250
  %v443 = vpack.c.b16 %v255, %v251
  %v444 = vpack.c.b16 %v256, %v252
  %v445 = vpack.c.b16 %v261, %v257
  %v446 = vpack.c.b16 %v262, %v258
  %v447 = vpack.c.b16 %v263, %v259
  %v448 = vpack.c.b16 %v264, %v260
  %v449 = vpack.c.b16 %v269, %v265
  %v450 = vpack.c.b16 %v270, %v266
  %v451 = vpack.c.b16 %v271, %v267
  %v452 = vpack.c.b16 %v272, %v268
  %v453 = vpack.c.b16 %v277, %v273
  %v454 = vpack.c.b16 %v278, %v274
  %v455 = vpack.c.b16 %v279, %v275
  %v456 = vpack.c.b16 %v280, %v276
  %v457 = vpack.c.b16 %v285, %v281
  %v458 = vpack.c.b16 %v286, %v282
  %v459 = vpack.c.b16 %v287, %v283
  %v460 = vpack.c.b16 %v288, %v284
  %v461 = vpack.c.b16 %v293, %v289
  %v462 = vpack.c.b16 %v294, %v290
  %v463 = vpack.c.b16 %v295, %v291
  %v464 = vpack.c.b16 %v296, %v292
  %v465 = vpack.c.b16 %v301, %v297
  %v466 = vpack.c.b16 %v302, %v298
  %v467 = vpack.c.b16 %v303, %v299
  %v468 = vpack.c.b16 %v304, %v300
  %v469 = vpack.c.b16 %v309, %v305
  %v470 = vpack.c.b16 %v310, %v306
  %v471 = vpack.c.b16 %v311, %v307
  %v472 = vpack.c.b16 %v312, %v308
  %v473 = vpack.c.b16 %v317, %v313
  %v474 = vpack.c.b16 %v318, %v314
  %v475 = vpack.c.b16 %v319, %v315
  %v476 = vpack.c.b16 %v320, %v316
  %v477 = vpack.c.b16 %v325, %v321
  %v478 = vpack.c.b16 %v326, %v322
  %v479 = vpack.c.b16 %v327, %v323
  %v480 = vpack.c.b16 %v328, %v324
  %v481 = vpack.c.b16 %v333, %v329
  %v482 = vpack.c.b16 %v334, %v330
  %v483 = vpack.c.b16 %v335, %v331
  %v484 = vpack.c.b16 %v336, %v332
  %v485 = vpack.c.b16 %v341, %v337
  %v486 = vpack.c.b16 %v342, %v338
  %v487 = vpack.c.b16 %v343, %v339
  %v488 = vpack.c.b16 %v344, %v340
  %v489 = vpack.c.b16 %v349, %v345
  %v490 = vpack.c.b16 %v350, %v346
  %v491 = vpack.c.b16 %v351, %v347
  %v492 = vpack.c.b16 %v352, %v348
  %v493 = vpack.c.b16 %v357, %v353
  %v494 = vpack.c.b16 %v358, %v354
  %v495 = vpack.c.b16 %v359, %v355
  %v496 = vpack.c.b16 %v360, %v356
  %v497 = vpack.c.b16 %v365, %v361
  %v498 = vpack.c.b16 %v366, %v362
  %v499 = vpack.c.b16 %v367, %v363
  %v500 = vpack.c.b16 %v368, %v364
  %v501 = vpack.c.b16 %v373, %v369
  %v502 = vpack.c.b16 %v374, %v370
  %v503 = vpack.c.b16 %v375, %v371
  %v504 = vpack.c.b16 %v376, %v372
  %v505 = vpack.c.b16 %v381, %v377
  %v506 = vpack.c.b16 %v382, %v378
  %v507 = vpack.c.b16 %v383, %v379
  %v508 = vpack.c.b16 %v384, %v380
  %v509 = vpack.c.b16 %v389, %v385
  %v510 = vpack.c.b16 %v390, %v386
  %v511 = vpack.c.b16 %v391, %v387
  %v512 = vpack.c.b16 %v392, %v388
  %v513 = vpack.c.b16 %v397, %v393
  %v514 = vpack.c.b16 %v398, %v394
  %v515 = vpack.c.b16 %v399, %v395
  %v516 = vpack.c.b16 %v400, %v396
  %v517 = vpack.c.b16 %v405, %v401
  %v518 = vpack.c.b16 %v406, %v402
  %v519 = vpack.c.b16 %v407, %v403
  %v520 = vpack.c.b16 %v408, %v404
  %v521 = vpack.c.b16 %v413, %v409
  %v522 = vpack.c.b16 %v414, %v410
  %v523 = vpack.c.b16 %v415, %v411
  %v524 = vpack.c.b16 %v416, %v412
  %v525 = vpack.c.b16 %v421, %v417
  %v526 = vpack.c.b16 %v422, %v418
  %v527 = vpack.c.b16 %v423, %v419
  %v528 = vpack.c.b16 %v424, %v420
  %v529 = vpack.c.b16 %v429, %v425
  %v530 = vpack.c.b16 %v430, %v426
  %v531 = vpack.c.b16 %v431, %v427
  %v532 = vpack.c.b16 %v432, %v428
  %v533 = vpack.c.b16 %v437, %v433
  %v534 = vpack.c.b16 %v438, %v434
  %v535 = vpack.c.b16 %v439, %v435
  %v536 = vpack.c.b16 %v440, %v436
  %633 = vmatprep.subr.bf16.mxu0 %v470
  %634 = vmatpush1.bf16.msra.mxu0 %v469
  %635 = vmatprep.subr.bf16.mxu0 %v466
  %636 = vmatpush1.bf16.msra.mxu0 %v465
  %637 = vmatprep.subr.bf16.mxu0 %v462
  %638 = vmatpush1.bf16.msra.mxu0 %v461
  %639 = vmatprep.subr.bf16.mxu0 %v458
  %640 = vmatpush1.bf16.msra.mxu0 %v457
  %641 = vmatprep.subr.bf16.mxu0 %v454
  %642 = vmatpush1.bf16.msra.mxu0 %v453
  %643 = vmatprep.subr.bf16.mxu0 %v450
  %644 = vmatpush1.bf16.msra.mxu0 %v449
  %645 = vmatprep.subr.bf16.mxu0 %v446
  %646 = vmatpush1.bf16.msra.mxu0 %v445
  %647 = vmatprep.subr.bf16.mxu0 %v442
  %648 = vmatpush1.bf16.msra.mxu0 %v441
  %649 = vmatprep.subr.bf16.mxu0 %v502
  %650 = vmatpush2.bf16.msra.mxu0 %v501
  %651 = vmatprep.subr.bf16.mxu0 %v498
  %652 = vmatpush2.bf16.msra.mxu0 %v497
  %653 = vmatprep.subr.bf16.mxu0 %v494
  %654 = vmatpush2.bf16.msra.mxu0 %v493
  %655 = vmatprep.subr.bf16.mxu0 %v490
  %656 = vmatpush2.bf16.msra.mxu0 %v489
  %657 = vmatprep.subr.bf16.mxu0 %v486
  %658 = vmatpush2.bf16.msra.mxu0 %v485
  %659 = vmatprep.subr.bf16.mxu0 %v482
  %660 = vmatpush2.bf16.msra.mxu0 %v481
  %661 = vmatprep.subr.bf16.mxu0 %v478
  %662 = vmatpush2.bf16.msra.mxu0 %v477
  %663 = vmatprep.subr.bf16.mxu0 %v474
  %664 = vmatpush2.bf16.msra.mxu0 %v473
  %665 = vmatprep.mubr.bf16.mxu0 %v148
  %666 = vmatmul.mubr.bf16.gmra.mxu0 %v147
  %v667 = vpop.f32.mrf.mxu0
  %v668 = vadd.f32 %v120, %v667
  %v669 = vpop.f32.mrf.mxu0
  %v670 = vadd.f32 %v124, %v669
  %v671 = vpop.f32.mrf.mxu0
  %v672 = vadd.f32 %v120, %v671
  %v673 = vpop.f32.mrf.mxu0
  %v674 = vadd.f32 %v124, %v673
  %675 = vdwg.mxu0
  %676 = vmatprep.subr.bf16.mxu0 %v534
  %677 = vmatpush1.bf16.msra.mxu0 %v533
  %678 = vmatprep.subr.bf16.mxu0 %v530
  %679 = vmatpush1.bf16.msra.mxu0 %v529
  %680 = vmatprep.subr.bf16.mxu0 %v526
  %681 = vmatpush1.bf16.msra.mxu0 %v525
  %682 = vmatprep.subr.bf16.mxu0 %v522
  %683 = vmatpush1.bf16.msra.mxu0 %v521
  %684 = vmatprep.subr.bf16.mxu0 %v518
  %685 = vmatpush1.bf16.msra.mxu0 %v517
  %686 = vmatprep.subr.bf16.mxu0 %v514
  %687 = vmatpush1.bf16.msra.mxu0 %v513
  %688 = vmatprep.subr.bf16.mxu0 %v510
  %689 = vmatpush1.bf16.msra.mxu0 %v509
  %690 = vmatprep.subr.bf16.mxu0 %v506
  %691 = vmatpush1.bf16.msra.mxu0 %v505
  %692 = vmatprep.subr.bf16.mxu0 0
  %693 = vmatpush2.bf16.msra.mxu0 0
  %694 = vmatprep.subr.bf16.mxu0 0
  %695 = vmatpush2.bf16.msra.mxu0 0
  %696 = vmatprep.subr.bf16.mxu0 0
  %697 = vmatpush2.bf16.msra.mxu0 0
  %698 = vmatprep.subr.bf16.mxu0 0
  %699 = vmatpush2.bf16.msra.mxu0 0
  %700 = vmatprep.subr.bf16.mxu0 0
  %701 = vmatpush2.bf16.msra.mxu0 0
  %702 = vmatprep.subr.bf16.mxu0 0
  %703 = vmatpush2.bf16.msra.mxu0 0
  %704 = vmatprep.subr.bf16.mxu0 0
  %705 = vmatpush2.bf16.msra.mxu0 0
  %706 = vmatprep.subr.bf16.mxu0 0
  %707 = vmatpush2.bf16.msra.mxu0 0
  %708 = vmatprep.mubr.bf16.mxu0 0
  %709 = vmatmul.mubr.bf16.gmra.mxu0 %v149
  %v710 = vpop.f32.mrf.mxu0
  %v711 = vadd.f32 %v668, %v710
  %v712 = vpop.f32.mrf.mxu0
  %v713 = vadd.f32 %v670, %v712
  %v714 = vpop.f32.mrf.mxu0
  %v715 = vadd.f32 %v672, %v714
  %v716 = vpop.f32.mrf.mxu0
  %v717 = vadd.f32 %v674, %v716
  %718 = vdwg.mxu0
  %719 = vmatprep.subr.bf16.mxu0 %v472
  %720 = vmatpush1.bf16.msra.mxu0 %v471
  %721 = vmatprep.subr.bf16.mxu0 %v468
  %722 = vmatpush1.bf16.msra.mxu0 %v467
  %723 = vmatprep.subr.bf16.mxu0 %v464
  %724 = vmatpush1.bf16.msra.mxu0 %v463
  %725 = vmatprep.subr.bf16.mxu0 %v460
  %726 = vmatpush1.bf16.msra.mxu0 %v459
  %727 = vmatprep.subr.bf16.mxu0 %v456
  %728 = vmatpush1.bf16.msra.mxu0 %v455
  %729 = vmatprep.subr.bf16.mxu0 %v452
  %730 = vmatpush1.bf16.msra.mxu0 %v451
  %731 = vmatprep.subr.bf16.mxu0 %v448
  %732 = vmatpush1.bf16.msra.mxu0 %v447
  %733 = vmatprep.subr.bf16.mxu0 %v444
  %734 = vmatpush1.bf16.msra.mxu0 %v443
  %735 = vmatprep.subr.bf16.mxu0 %v504
  %736 = vmatpush2.bf16.msra.mxu0 %v503
  %737 = vmatprep.subr.bf16.mxu0 %v500
  %738 = vmatpush2.bf16.msra.mxu0 %v499
  %739 = vmatprep.subr.bf16.mxu0 %v496
  %740 = vmatpush2.bf16.msra.mxu0 %v495
  %741 = vmatprep.subr.bf16.mxu0 %v492
  %742 = vmatpush2.bf16.msra.mxu0 %v491
  %743 = vmatprep.subr.bf16.mxu0 %v488
  %744 = vmatpush2.bf16.msra.mxu0 %v487
  %745 = vmatprep.subr.bf16.mxu0 %v484
  %746 = vmatpush2.bf16.msra.mxu0 %v483
  %747 = vmatprep.subr.bf16.mxu0 %v480
  %748 = vmatpush2.bf16.msra.mxu0 %v479
  %749 = vmatprep.subr.bf16.mxu0 %v476
  %750 = vmatpush2.bf16.msra.mxu0 %v475
  %751 = vmatprep.mubr.bf16.mxu0 %v148
  %752 = vmatmul.mubr.bf16.gmra.mxu0 %v147
  %v753 = vpop.f32.mrf.mxu0
  %v754 = vadd.f32 %v128, %v753
  %v755 = vpop.f32.mrf.mxu0
  %v756 = vadd.f32 %v132, %v755
  %v757 = vpop.f32.mrf.mxu0
  %v758 = vadd.f32 %v128, %v757
  %v759 = vpop.f32.mrf.mxu0
  %v760 = vadd.f32 %v132, %v759
  %761 = vdwg.mxu0
  %762 = vmatprep.subr.bf16.mxu0 %v536
  %763 = vmatpush1.bf16.msra.mxu0 %v535
  %764 = vmatprep.subr.bf16.mxu0 %v532
  %765 = vmatpush1.bf16.msra.mxu0 %v531
  %766 = vmatprep.subr.bf16.mxu0 %v528
  %767 = vmatpush1.bf16.msra.mxu0 %v527
  %768 = vmatprep.subr.bf16.mxu0 %v524
  %769 = vmatpush1.bf16.msra.mxu0 %v523
  %770 = vmatprep.subr.bf16.mxu0 %v520
  %771 = vmatpush1.bf16.msra.mxu0 %v519
  %772 = vmatprep.subr.bf16.mxu0 %v516
  %773 = vmatpush1.bf16.msra.mxu0 %v515
  %774 = vmatprep.subr.bf16.mxu0 %v512
  %775 = vmatpush1.bf16.msra.mxu0 %v511
  %776 = vmatprep.subr.bf16.mxu0 %v508
  %777 = vmatpush1.bf16.msra.mxu0 %v507
  %778 = vmatprep.subr.bf16.mxu0 0
  %779 = vmatpush2.bf16.msra.mxu0 0
  %780 = vmatprep.subr.bf16.mxu0 0
  %781 = vmatpush2.bf16.msra.mxu0 0
  %782 = vmatprep.subr.bf16.mxu0 0
  %783 = vmatpush2.bf16.msra.mxu0 0
  %784 = vmatprep.subr.bf16.mxu0 0
  %785 = vmatpush2.bf16.msra.mxu0 0
  %786 = vmatprep.subr.bf16.mxu0 0
  %787 = vmatpush2.bf16.msra.mxu0 0
  %788 = vmatprep.subr.bf16.mxu0 0
  %789 = vmatpush2.bf16.msra.mxu0 0
  %790 = vmatprep.subr.bf16.mxu0 0
  %791 = vmatpush2.bf16.msra.mxu0 0
  %792 = vmatprep.subr.bf16.mxu0 0
  %793 = vmatpush2.bf16.msra.mxu0 0
  %794 = vmatprep.mubr.bf16.mxu0 0
  %795 = vmatmul.mubr.bf16.gmra.mxu0 %v149
  %v796 = vpop.f32.mrf.mxu0
  %v797 = vadd.f32 %v754, %v796
  %v798 = vpop.f32.mrf.mxu0
  %v799 = vadd.f32 %v756, %v798
  %v800 = vpop.f32.mrf.mxu0
  %v801 = vadd.f32 %v758, %v800
  %v802 = vpop.f32.mrf.mxu0
  %v803 = vadd.f32 %v760, %v802
  %804 = vdwg.mxu0
  %v805 = vpack.c.bf16 %v715, %v711
  %v806 = vpack.c.bf16 %v717, %v713
  %v807 = vpack.c.bf16 %v801, %v797
  %v808 = vpack.c.bf16 %v803, %v799
  %v813 = vunpack.c.l.b16 %v805
  %v814 = vunpack.c.l.b16 %v806
  %v815 = vunpack.c.l.b16 %v807
  %v816 = vunpack.c.l.b16 %v808
  %v817 = vunpack.c.h.b16 %v805
  %v818 = vunpack.c.h.b16 %v806
  %v819 = vunpack.c.h.b16 %v807
  %v820 = vunpack.c.h.b16 %v808
  %v821 = vpack.c.b16 %v814, %v813
  %v822 = vpack.c.b16 %v816, %v815
  %v823 = vpack.c.b16 %v818, %v817
  %v824 = vpack.c.b16 %v820, %v819
  %829 = vst [vmem:[%s3] sm:$0xff] %v821
  %830 = vst [vmem:[%s3 + $0x8] sm:$0xff] %v822
  %831 = vst [vmem:[%s3 + $0x10] sm:$0xff] %v823
  %832 = vst [vmem:[%s3 + $0x18] sm:$0xff] %v824
  // Predicated region
  $region14: #{fwd.11} parent=0 // pred_check
    _
  $region15: #{fwd.11} parent=0 // pred_check_branch
    %834 = sbr.rel (0) target = $region17
  $region16: #{fwd.11} parent=0 // pred_region
    _
  $region17: #{fwd.11} parent=0 // pred_fallthru
    _
  // Predicated region
  $region18: #{fwd.11} parent=0 // pred_check
    _
  $region19: #{fwd.11} parent=0 // pred_check_branch
    %836 = sbr.rel (0) target = $region21
  $region20: #{fwd.11} parent=0 // pred_region
    _
  $region21: #{fwd.11} parent=0 // pred_fallthru
    _

// kernel: fwd.13
$region0: #{fwd.13}
  #allocation0 [shape = 'u32[]', space=smem, size = 0x4, offset = 0x4, fixed_abs, tag = 'smem constant byte address 0x4 - core index']
  #allocation1 [shape = 'u32[144,128]{1,0:T(1,128)}', space=vmem, size = 0x12000, scoped, tag = 'internal scratch']
  %s0 = inlined_call_operand.vmem [shape: bf16[16,640], index: 0, kind: input, shape index: {}]
  %s1 = inlined_call_operand.vmem [shape: bf16[640,256], index: 1, kind: input, shape index: {}]
  %s2 = inlined_call_operand.vmem [shape: f32[1,256], index: 2, kind: input, shape index: {}]
  %s3 = inlined_call_operand.vmem [shape: bf16[256,128], index: 3, kind: input, shape index: {}]
  %s4 = inlined_call_operand.vmem [shape: f32[1,128], index: 4, kind: input, shape index: {}]
  %s5 = inlined_call_operand.vmem [shape: f32[16,128], index: 5, kind: output, shape index: {}]
  %s6 = sld [smem:[#allocation0]]
  $region30: #{fwd.13} parent=0
    _
  %s8 = ssub.s32 1, %s6
  %s9 = scalar_select 0, %s8, %s6
  // Predicated region
  $region2: #{fwd.13} parent=0 // pred_check
    _
  $region3: #{fwd.13} parent=0 // pred_check_branch
    %11 = sbr.rel (0) target = $region5
  $region4: #{fwd.13} parent=0 // pred_region
    _
  $region5: #{fwd.13} parent=0 // pred_fallthru
    _
  // Predicated region
  $region6: #{fwd.13} parent=0 // pred_check
    _
  $region7: #{fwd.13} parent=0 // pred_check_branch
    %13 = sbr.rel (0) target = $region9
  $region8: #{fwd.13} parent=0 // pred_region
    _
  $region9: #{fwd.13} parent=0 // pred_fallthru
    _
  // Predicated region
  $region10: #{fwd.13} parent=0 // pred_check
    _
  $region11: #{fwd.13} parent=0 // pred_check_branch
    %15 = sbr.rel (0) target = $region13
  $region12: #{fwd.13} parent=0 // pred_region
    _
  $region13: #{fwd.13} parent=0 // pred_fallthru
    _
  // Predicated region
  $region14: #{fwd.13} parent=0 // pred_check
    _
  $region15: #{fwd.13} parent=0 // pred_check_branch
    %17 = sbr.rel (0) target = $region17
  $region16: #{fwd.13} parent=0 // pred_region
    _
  $region17: #{fwd.13} parent=0 // pred_fallthru
    _
  // Predicated region
  $region18: #{fwd.13} parent=0 // pred_check
    _
  $region19: #{fwd.13} parent=0 // pred_check_branch
    %19 = sbr.rel (0) target = $region21
  $region20: #{fwd.13} parent=0 // pred_region
    _
  $region21: #{fwd.13} parent=0 // pred_fallthru
    _
  %v21 = vld [vmem:[%s0] sm:$0xff]
  %v22 = vld [vmem:[%s0 + $0x8] sm:$0xff]
  %v23 = vld [vmem:[%s0 + $0x10] sm:$0xf]
  %v24 = vld [vmem:[%s0 + $0x14] sm:$0xff]
  %v25 = vld [vmem:[%s0 + $0x1c] sm:$0xff]
  %v26 = vld [vmem:[%s0 + $0x24] sm:$0xf]
  %v27 = vld [vmem:[%s1] sm:$0xff]
  %v28 = vld [vmem:[%s1 + $0x8] sm:$0xff]
  %v29 = vld [vmem:[%s1 + $0x10] sm:$0xff]
  %v30 = vld [vmem:[%s1 + $0x18] sm:$0xff]
  %v31 = vld [vmem:[%s1 + $0x20] sm:$0xff]
  %v32 = vld [vmem:[%s1 + $0x28] sm:$0xff]
  %v33 = vld [vmem:[%s1 + $0x30] sm:$0xff]
  %v34 = vld [vmem:[%s1 + $0x38] sm:$0xff]
  %v35 = vld [vmem:[%s1 + $0x40] sm:$0xff]
  %v36 = vld [vmem:[%s1 + $0x48] sm:$0xff]
  %v37 = vld [vmem:[%s1 + $0x50] sm:$0xff]
  %v38 = vld [vmem:[%s1 + $0x58] sm:$0xff]
  %v39 = vld [vmem:[%s1 + $0x60] sm:$0xff]
  %v40 = vld [vmem:[%s1 + $0x68] sm:$0xff]
  %v41 = vld [vmem:[%s1 + $0x70] sm:$0xff]
  %v42 = vld [vmem:[%s1 + $0x78] sm:$0xff]
  %v43 = vld [vmem:[%s1 + $0x80] sm:$0xff]
  %v44 = vld [vmem:[%s1 + $0x88] sm:$0xff]
  %v45 = vld [vmem:[%s1 + $0x90] sm:$0xff]
  %v46 = vld [vmem:[%s1 + $0x98] sm:$0xff]
  %v47 = vld [vmem:[%s1 + $0xa0] sm:$0xff]
  %v48 = vld [vmem:[%s1 + $0xa8] sm:$0xff]
  %v49 = vld [vmem:[%s1 + $0xb0] sm:$0xff]
  %v50 = vld [vmem:[%s1 + $0xb8] sm:$0xff]
  %v51 = vld [vmem:[%s1 + $0xc0] sm:$0xff]
  %v52 = vld [vmem:[%s1 + $0xc8] sm:$0xff]
  %v53 = vld [vmem:[%s1 + $0xd0] sm:$0xff]
  %v54 = vld [vmem:[%s1 + $0xd8] sm:$0xff]
  %v55 = vld [vmem:[%s1 + $0xe0] sm:$0xff]
  %v56 = vld [vmem:[%s1 + $0xe8] sm:$0xff]
  %v57 = vld [vmem:[%s1 + $0xf0] sm:$0xff]
  %v58 = vld [vmem:[%s1 + $0xf8] sm:$0xff]
  %v59 = vld [vmem:[%s1 + $0x100] sm:$0xff]
  %v60 = vld [vmem:[%s1 + $0x108] sm:$0xff]
  %v61 = vld [vmem:[%s1 + $0x110] sm:$0xff]
  %v62 = vld [vmem:[%s1 + $0x118] sm:$0xff]
  %v63 = vld [vmem:[%s1 + $0x120] sm:$0xff]
  %v64 = vld [vmem:[%s1 + $0x128] sm:$0xff]
  %v65 = vld [vmem:[%s1 + $0x130] sm:$0xff]
  %v66 = vld [vmem:[%s1 + $0x138] sm:$0xff]
  %v67 = vld [vmem:[%s1 + $0x140] sm:$0xff]
  %v68 = vld [vmem:[%s1 + $0x148] sm:$0xff]
  %v69 = vld [vmem:[%s1 + $0x150] sm:$0xff]
  %v70 = vld [vmem:[%s1 + $0x158] sm:$0xff]
  %v71 = vld [vmem:[%s1 + $0x160] sm:$0xff]
  %v72 = vld [vmem:[%s1 + $0x168] sm:$0xff]
  %v73 = vld [vmem:[%s1 + $0x170] sm:$0xff]
  %v74 = vld [vmem:[%s1 + $0x178] sm:$0xff]
  %v75 = vld [vmem:[%s1 + $0x180] sm:$0xff]
  %v76 = vld [vmem:[%s1 + $0x188] sm:$0xff]
  %v77 = vld [vmem:[%s1 + $0x190] sm:$0xff]
  %v78 = vld [vmem:[%s1 + $0x198] sm:$0xff]
  %v79 = vld [vmem:[%s1 + $0x1a0] sm:$0xff]
  %v80 = vld [vmem:[%s1 + $0x1a8] sm:$0xff]
  %v81 = vld [vmem:[%s1 + $0x1b0] sm:$0xff]
  %v82 = vld [vmem:[%s1 + $0x1b8] sm:$0xff]
  %v83 = vld [vmem:[%s1 + $0x1c0] sm:$0xff]
  %v84 = vld [vmem:[%s1 + $0x1c8] sm:$0xff]
  %v85 = vld [vmem:[%s1 + $0x1d0] sm:$0xff]
  %v86 = vld [vmem:[%s1 + $0x1d8] sm:$0xff]
  %v87 = vld [vmem:[%s1 + $0x1e0] sm:$0xff]
  %v88 = vld [vmem:[%s1 + $0x1e8] sm:$0xff]
  %v89 = vld [vmem:[%s1 + $0x1f0] sm:$0xff]
  %v90 = vld [vmem:[%s1 + $0x1f8] sm:$0xff]
  %v91 = vld [vmem:[%s1 + $0x200] sm:$0xff]
  %v92 = vld [vmem:[%s1 + $0x208] sm:$0xff]
  %v93 = vld [vmem:[%s1 + $0x210] sm:$0xff]
  %v94 = vld [vmem:[%s1 + $0x218] sm:$0xff]
  %v95 = vld [vmem:[%s1 + $0x220] sm:$0xff]
  %v96 = vld [vmem:[%s1 + $0x228] sm:$0xff]
  %v97 = vld [vmem:[%s1 + $0x230] sm:$0xff]
  %v98 = vld [vmem:[%s1 + $0x238] sm:$0xff]
  %v99 = vld [vmem:[%s1 + $0x240] sm:$0xff]
  %v100 = vld [vmem:[%s1 + $0x248] sm:$0xff]
  %v101 = vld [vmem:[%s1 + $0x250] sm:$0xff]
  %v102 = vld [vmem:[%s1 + $0x258] sm:$0xff]
  %v103 = vld [vmem:[%s1 + $0x260] sm:$0xff]
  %v104 = vld [vmem:[%s1 + $0x268] sm:$0xff]
  %v105 = vld [vmem:[%s1 + $0x270] sm:$0xff]
  %v106 = vld [vmem:[%s1 + $0x278] sm:$0xff]
  %v107 = vld [vmem:[%s2] sm:$0x3]
  %v109 = vlaneseq
  %v110 = vshrl.u32 %v109, 7
  %v111 = vsub.s32 0, %v110
  %v112 = vrot.slane %v107, %v111
  %v113 = vlaneseq
  %v114 = vshrl.u32 %v113, 7
  %v115 = vsub.s32 1, %v114
  %v116 = vrot.slane %v107, %v115
  %v125 = vunpack.c.l.b16 %v21
  %v126 = vunpack.c.h.b16 %v21
  %v127 = vunpack.c.l.b16 %v22
  %v128 = vunpack.c.h.b16 %v22
  %v129 = vunpack.c.l.b16 %v23
  %v130 = vunpack.c.l.b16 %v24
  %v131 = vunpack.c.h.b16 %v24
  %v132 = vunpack.c.l.b16 %v25
  %v133 = vunpack.c.h.b16 %v25
  %v134 = vunpack.c.l.b16 %v26
  %v135 = vpack.c.b16 %v130, %v125
  %v136 = vpack.c.b16 %v131, %v126
  %v137 = vpack.c.b16 %v132, %v127
  %v138 = vpack.c.b16 %v133, %v128
  %v139 = vpack.c.b16 %v134, %v129
  %v225 = vunpack.c.l.b16 %v27
  %v226 = vunpack.c.h.b16 %v27
  %v227 = vunpack.c.l.b16 %v28
  %v228 = vunpack.c.h.b16 %v28
  %v229 = vunpack.c.l.b16 %v29
  %v230 = vunpack.c.h.b16 %v29
  %v231 = vunpack.c.l.b16 %v30
  %v232 = vunpack.c.h.b16 %v30
  %v233 = vunpack.c.l.b16 %v31
  %v234 = vunpack.c.h.b16 %v31
  %v235 = vunpack.c.l.b16 %v32
  %v236 = vunpack.c.h.b16 %v32
  %v237 = vunpack.c.l.b16 %v33
  %v238 = vunpack.c.h.b16 %v33
  %v239 = vunpack.c.l.b16 %v34
  %v240 = vunpack.c.h.b16 %v34
  %v241 = vunpack.c.l.b16 %v35
  %v242 = vunpack.c.h.b16 %v35
  %v243 = vunpack.c.l.b16 %v36
  %v244 = vunpack.c.h.b16 %v36
  %v245 = vunpack.c.l.b16 %v37
  %v246 = vunpack.c.h.b16 %v37
  %v247 = vunpack.c.l.b16 %v38
  %v248 = vunpack.c.h.b16 %v38
  %v249 = vunpack.c.l.b16 %v39
  %v250 = vunpack.c.h.b16 %v39
  %v251 = vunpack.c.l.b16 %v40
  %v252 = vunpack.c.h.b16 %v40
  %v253 = vunpack.c.l.b16 %v41
  %v254 = vunpack.c.h.b16 %v41
  %v255 = vunpack.c.l.b16 %v42
  %v256 = vunpack.c.h.b16 %v42
  %v257 = vunpack.c.l.b16 %v43
  %v258 = vunpack.c.h.b16 %v43
  %v259 = vunpack.c.l.b16 %v44
  %v260 = vunpack.c.h.b16 %v44
  %v261 = vunpack.c.l.b16 %v45
  %v262 = vunpack.c.h.b16 %v45
  %v263 = vunpack.c.l.b16 %v46
  %v264 = vunpack.c.h.b16 %v46
  %v265 = vunpack.c.l.b16 %v47
  %v266 = vunpack.c.h.b16 %v47
  %v267 = vunpack.c.l.b16 %v48
  %v268 = vunpack.c.h.b16 %v48
  %v269 = vunpack.c.l.b16 %v49
  %v270 = vunpack.c.h.b16 %v49
  %v271 = vunpack.c.l.b16 %v50
  %v272 = vunpack.c.h.b16 %v50
  %v273 = vunpack.c.l.b16 %v51
  %v274 = vunpack.c.h.b16 %v51
  %v275 = vunpack.c.l.b16 %v52
  %v276 = vunpack.c.h.b16 %v52
  %v277 = vunpack.c.l.b16 %v53
  %v278 = vunpack.c.h.b16 %v53
  %v279 = vunpack.c.l.b16 %v54
  %v280 = vunpack.c.h.b16 %v54
  %v281 = vunpack.c.l.b16 %v55
  %v282 = vunpack.c.h.b16 %v55
  %v283 = vunpack.c.l.b16 %v56
  %v284 = vunpack.c.h.b16 %v56
  %v285 = vunpack.c.l.b16 %v57
  %v286 = vunpack.c.h.b16 %v57
  %v287 = vunpack.c.l.b16 %v58
  %v288 = vunpack.c.h.b16 %v58
  %v289 = vunpack.c.l.b16 %v59
  %v290 = vunpack.c.h.b16 %v59
  %v291 = vunpack.c.l.b16 %v60
  %v292 = vunpack.c.h.b16 %v60
  %v293 = vunpack.c.l.b16 %v61
  %v294 = vunpack.c.h.b16 %v61
  %v295 = vunpack.c.l.b16 %v62
  %v296 = vunpack.c.h.b16 %v62
  %v297 = vunpack.c.l.b16 %v63
  %v298 = vunpack.c.h.b16 %v63
  %v299 = vunpack.c.l.b16 %v64
  %v300 = vunpack.c.h.b16 %v64
  %v301 = vunpack.c.l.b16 %v65
  %v302 = vunpack.c.h.b16 %v65
  %v303 = vunpack.c.l.b16 %v66
  %v304 = vunpack.c.h.b16 %v66
  %v305 = vunpack.c.l.b16 %v67
  %v306 = vunpack.c.h.b16 %v67
  %v307 = vunpack.c.l.b16 %v68
  %v308 = vunpack.c.h.b16 %v68
  %v309 = vunpack.c.l.b16 %v69
  %v310 = vunpack.c.h.b16 %v69
  %v311 = vunpack.c.l.b16 %v70
  %v312 = vunpack.c.h.b16 %v70
  %v313 = vunpack.c.l.b16 %v71
  %v314 = vunpack.c.h.b16 %v71
  %v315 = vunpack.c.l.b16 %v72
  %v316 = vunpack.c.h.b16 %v72
  %v317 = vunpack.c.l.b16 %v73
  %v318 = vunpack.c.h.b16 %v73
  %v319 = vunpack.c.l.b16 %v74
  %v320 = vunpack.c.h.b16 %v74
  %v321 = vunpack.c.l.b16 %v75
  %v322 = vunpack.c.h.b16 %v75
  %v323 = vunpack.c.l.b16 %v76
  %v324 = vunpack.c.h.b16 %v76
  %v325 = vunpack.c.l.b16 %v77
  %v326 = vunpack.c.h.b16 %v77
  %v327 = vunpack.c.l.b16 %v78
  %v328 = vunpack.c.h.b16 %v78
  %v329 = vunpack.c.l.b16 %v79
  %v330 = vunpack.c.h.b16 %v79
  %v331 = vunpack.c.l.b16 %v80
  %v332 = vunpack.c.h.b16 %v80
  %v333 = vunpack.c.l.b16 %v81
  %v334 = vunpack.c.h.b16 %v81
  %v335 = vunpack.c.l.b16 %v82
  %v336 = vunpack.c.h.b16 %v82
  %v337 = vunpack.c.l.b16 %v83
  %v338 = vunpack.c.h.b16 %v83
  %v339 = vunpack.c.l.b16 %v84
  %v340 = vunpack.c.h.b16 %v84
  %v341 = vunpack.c.l.b16 %v85
  %v342 = vunpack.c.h.b16 %v85
  %v343 = vunpack.c.l.b16 %v86
  %v344 = vunpack.c.h.b16 %v86
  %v345 = vunpack.c.l.b16 %v87
  %v346 = vunpack.c.h.b16 %v87
  %v347 = vunpack.c.l.b16 %v88
  %v348 = vunpack.c.h.b16 %v88
  %v349 = vunpack.c.l.b16 %v89
  %v350 = vunpack.c.h.b16 %v89
  %v351 = vunpack.c.l.b16 %v90
  %v352 = vunpack.c.h.b16 %v90
  %v353 = vunpack.c.l.b16 %v91
  %v354 = vunpack.c.h.b16 %v91
  %v355 = vunpack.c.l.b16 %v92
  %v356 = vunpack.c.h.b16 %v92
  %v357 = vunpack.c.l.b16 %v93
  %v358 = vunpack.c.h.b16 %v93
  %v359 = vunpack.c.l.b16 %v94
  %v360 = vunpack.c.h.b16 %v94
  %v361 = vunpack.c.l.b16 %v95
  %v362 = vunpack.c.h.b16 %v95
  %v363 = vunpack.c.l.b16 %v96
  %v364 = vunpack.c.h.b16 %v96
  %v365 = vunpack.c.l.b16 %v97
  %v366 = vunpack.c.h.b16 %v97
  %v367 = vunpack.c.l.b16 %v98
  %v368 = vunpack.c.h.b16 %v98
  %v369 = vunpack.c.l.b16 %v99
  %v370 = vunpack.c.h.b16 %v99
  %v371 = vunpack.c.l.b16 %v100
  %v372 = vunpack.c.h.b16 %v100
  %v373 = vunpack.c.l.b16 %v101
  %v374 = vunpack.c.h.b16 %v101
  %v375 = vunpack.c.l.b16 %v102
  %v376 = vunpack.c.h.b16 %v102
  %v377 = vunpack.c.l.b16 %v103
  %v378 = vunpack.c.h.b16 %v103
  %v379 = vunpack.c.l.b16 %v104
  %v380 = vunpack.c.h.b16 %v104
  %v381 = vunpack.c.l.b16 %v105
  %v382 = vunpack.c.h.b16 %v105
  %v383 = vunpack.c.l.b16 %v106
  %v384 = vunpack.c.h.b16 %v106
  %v385 = vpack.c.b16 %v227, %v225
  %v386 = vpack.c.b16 %v228, %v226
  %v387 = vpack.c.b16 %v231, %v229
  %v388 = vpack.c.b16 %v232, %v230
  %v389 = vpack.c.b16 %v235, %v233
  %v390 = vpack.c.b16 %v236, %v234
  %v391 = vpack.c.b16 %v239, %v237
  %v392 = vpack.c.b16 %v240, %v238
  %v393 = vpack.c.b16 %v243, %v241
  %v394 = vpack.c.b16 %v244, %v242
  %v395 = vpack.c.b16 %v247, %v245
  %v396 = vpack.c.b16 %v248, %v246
  %v397 = vpack.c.b16 %v251, %v249
  %v398 = vpack.c.b16 %v252, %v250
  %v399 = vpack.c.b16 %v255, %v253
  %v400 = vpack.c.b16 %v256, %v254
  %v401 = vpack.c.b16 %v259, %v257
  %v402 = vpack.c.b16 %v260, %v258
  %v403 = vpack.c.b16 %v263, %v261
  %v404 = vpack.c.b16 %v264, %v262
  %v405 = vpack.c.b16 %v267, %v265
  %v406 = vpack.c.b16 %v268, %v266
  %v407 = vpack.c.b16 %v271, %v269
  %v408 = vpack.c.b16 %v272, %v270
  %v409 = vpack.c.b16 %v275, %v273
  %v410 = vpack.c.b16 %v276, %v274
  %v411 = vpack.c.b16 %v279, %v277
  %v412 = vpack.c.b16 %v280, %v278
  %v413 = vpack.c.b16 %v283, %v281
  %v414 = vpack.c.b16 %v284, %v282
  %v415 = vpack.c.b16 %v287, %v285
  %v416 = vpack.c.b16 %v288, %v286
  %v417 = vpack.c.b16 %v291, %v289
  %v418 = vpack.c.b16 %v292, %v290
  %v419 = vpack.c.b16 %v295, %v293
  %v420 = vpack.c.b16 %v296, %v294
  %v421 = vpack.c.b16 %v299, %v297
  %v422 = vpack.c.b16 %v300, %v298
  %v423 = vpack.c.b16 %v303, %v301
  %v424 = vpack.c.b16 %v304, %v302
  %v425 = vpack.c.b16 %v307, %v305
  %v426 = vpack.c.b16 %v308, %v306
  %v427 = vpack.c.b16 %v311, %v309
  %v428 = vpack.c.b16 %v312, %v310
  %v429 = vpack.c.b16 %v315, %v313
  %v430 = vpack.c.b16 %v316, %v314
  %v431 = vpack.c.b16 %v319, %v317
  %v432 = vpack.c.b16 %v320, %v318
  %v433 = vpack.c.b16 %v323, %v321
  %v434 = vpack.c.b16 %v324, %v322
  %v435 = vpack.c.b16 %v327, %v325
  %v436 = vpack.c.b16 %v328, %v326
  %v437 = vpack.c.b16 %v331, %v329
  %v438 = vpack.c.b16 %v332, %v330
  %v439 = vpack.c.b16 %v335, %v333
  %v440 = vpack.c.b16 %v336, %v334
  %v441 = vpack.c.b16 %v339, %v337
  %v442 = vpack.c.b16 %v340, %v338
  %v443 = vpack.c.b16 %v343, %v341
  %v444 = vpack.c.b16 %v344, %v342
  %v445 = vpack.c.b16 %v347, %v345
  %v446 = vpack.c.b16 %v348, %v346
  %v447 = vpack.c.b16 %v351, %v349
  %v448 = vpack.c.b16 %v352, %v350
  %v449 = vpack.c.b16 %v355, %v353
  %v450 = vpack.c.b16 %v356, %v354
  %v451 = vpack.c.b16 %v359, %v357
  %v452 = vpack.c.b16 %v360, %v358
  %v453 = vpack.c.b16 %v363, %v361
  %v454 = vpack.c.b16 %v364, %v362
  %v455 = vpack.c.b16 %v367, %v365
  %v456 = vpack.c.b16 %v368, %v366
  %v457 = vpack.c.b16 %v371, %v369
  %v458 = vpack.c.b16 %v372, %v370
  %v459 = vpack.c.b16 %v375, %v373
  %v460 = vpack.c.b16 %v376, %v374
  %v461 = vpack.c.b16 %v379, %v377
  %v462 = vpack.c.b16 %v380, %v378
  %v463 = vpack.c.b16 %v383, %v381
  %v464 = vpack.c.b16 %v384, %v382
  %545 = vmatprep.subr.bf16.mxu0 %v400
  %546 = vmatpush1.bf16.msra.mxu0 %v399
  %547 = vmatprep.subr.bf16.mxu0 %v398
  %548 = vmatpush1.bf16.msra.mxu0 %v397
  %549 = vmatprep.subr.bf16.mxu0 %v396
  %550 = vmatpush1.bf16.msra.mxu0 %v395
  %551 = vmatprep.subr.bf16.mxu0 %v394
  %552 = vmatpush1.bf16.msra.mxu0 %v393
  %553 = vmatprep.subr.bf16.mxu0 %v392
  %554 = vmatpush1.bf16.msra.mxu0 %v391
  %555 = vmatprep.subr.bf16.mxu0 %v390
  %556 = vmatpush1.bf16.msra.mxu0 %v389
  %557 = vmatprep.subr.bf16.mxu0 %v388
  %558 = vmatpush1.bf16.msra.mxu0 %v387
  %559 = vmatprep.subr.bf16.mxu0 %v386
  %560 = vmatpush1.bf16.msra.mxu0 %v385
  %561 = vmatprep.subr.bf16.mxu0 %v416
  %562 = vmatpush2.bf16.msra.mxu0 %v415
  %563 = vmatprep.subr.bf16.mxu0 %v414
  %564 = vmatpush2.bf16.msra.mxu0 %v413
  %565 = vmatprep.subr.bf16.mxu0 %v412
  %566 = vmatpush2.bf16.msra.mxu0 %v411
  %567 = vmatprep.subr.bf16.mxu0 %v410
  %568 = vmatpush2.bf16.msra.mxu0 %v409
  %569 = vmatprep.subr.bf16.mxu0 %v408
  %570 = vmatpush2.bf16.msra.mxu0 %v407
  %571 = vmatprep.subr.bf16.mxu0 %v406
  %572 = vmatpush2.bf16.msra.mxu0 %v405
  %573 = vmatprep.subr.bf16.mxu0 %v404
  %574 = vmatpush2.bf16.msra.mxu0 %v403
  %575 = vmatprep.subr.bf16.mxu0 %v402
  %576 = vmatpush2.bf16.msra.mxu0 %v401
  %577 = vmatprep.mubr.bf16.mxu0 %v136
  %578 = vmatmul.mubr.bf16.gmra.mxu0 %v135
  %v579 = vpop.f32.mrf.mxu0
  %v580 = vadd.f32 %v112, %v579
  %v581 = vpop.f32.mrf.mxu0
  %v582 = vadd.f32 %v116, %v581
  %v583 = vpop.f32.mrf.mxu0
  %v584 = vadd.f32 %v112, %v583
  %v585 = vpop.f32.mrf.mxu0
  %v586 = vadd.f32 %v116, %v585
  %587 = vdwg.mxu0
  %588 = vmatprep.subr.bf16.mxu0 %v432
  %589 = vmatpush1.bf16.msra.mxu0 %v431
  %590 = vmatprep.subr.bf16.mxu0 %v430
  %591 = vmatpush1.bf16.msra.mxu0 %v429
  %592 = vmatprep.subr.bf16.mxu0 %v428
  %593 = vmatpush1.bf16.msra.mxu0 %v427
  %594 = vmatprep.subr.bf16.mxu0 %v426
  %595 = vmatpush1.bf16.msra.mxu0 %v425
  %596 = vmatprep.subr.bf16.mxu0 %v424
  %597 = vmatpush1.bf16.msra.mxu0 %v423
  %598 = vmatprep.subr.bf16.mxu0 %v422
  %599 = vmatpush1.bf16.msra.mxu0 %v421
  %600 = vmatprep.subr.bf16.mxu0 %v420
  %601 = vmatpush1.bf16.msra.mxu0 %v419
  %602 = vmatprep.subr.bf16.mxu0 %v418
  %603 = vmatpush1.bf16.msra.mxu0 %v417
  %604 = vmatprep.subr.bf16.mxu0 %v448
  %605 = vmatpush2.bf16.msra.mxu0 %v447
  %606 = vmatprep.subr.bf16.mxu0 %v446
  %607 = vmatpush2.bf16.msra.mxu0 %v445
  %608 = vmatprep.subr.bf16.mxu0 %v444
  %609 = vmatpush2.bf16.msra.mxu0 %v443
  %610 = vmatprep.subr.bf16.mxu0 %v442
  %611 = vmatpush2.bf16.msra.mxu0 %v441
  %612 = vmatprep.subr.bf16.mxu0 %v440
  %613 = vmatpush2.bf16.msra.mxu0 %v439
  %614 = vmatprep.subr.bf16.mxu0 %v438
  %615 = vmatpush2.bf16.msra.mxu0 %v437
  %616 = vmatprep.subr.bf16.mxu0 %v436
  %617 = vmatpush2.bf16.msra.mxu0 %v435
  %618 = vmatprep.subr.bf16.mxu0 %v434
  %619 = vmatpush2.bf16.msra.mxu0 %v433
  %620 = vmatprep.mubr.bf16.mxu0 %v138
  %621 = vmatmul.mubr.bf16.gmra.mxu0 %v137
  %v622 = vpop.f32.mrf.mxu0
  %v623 = vadd.f32 %v580, %v622
  %v624 = vpop.f32.mrf.mxu0
  %v625 = vadd.f32 %v582, %v624
  %v626 = vpop.f32.mrf.mxu0
  %v627 = vadd.f32 %v584, %v626
  %v628 = vpop.f32.mrf.mxu0
  %v629 = vadd.f32 %v586, %v628
  %630 = vdwg.mxu0
  %631 = vmatprep.subr.bf16.mxu0 %v464
  %632 = vmatpush1.bf16.msra.mxu0 %v463
  %633 = vmatprep.subr.bf16.mxu0 %v462
  %634 = vmatpush1.bf16.msra.mxu0 %v461
  %635 = vmatprep.subr.bf16.mxu0 %v460
  %636 = vmatpush1.bf16.msra.mxu0 %v459
  %637 = vmatprep.subr.bf16.mxu0 %v458
  %638 = vmatpush1.bf16.msra.mxu0 %v457
  %639 = vmatprep.subr.bf16.mxu0 %v456
  %640 = vmatpush1.bf16.msra.mxu0 %v455
  %641 = vmatprep.subr.bf16.mxu0 %v454
  %642 = vmatpush1.bf16.msra.mxu0 %v453
  %643 = vmatprep.subr.bf16.mxu0 %v452
  %644 = vmatpush1.bf16.msra.mxu0 %v451
  %645 = vmatprep.subr.bf16.mxu0 %v450
  %646 = vmatpush1.bf16.msra.mxu0 %v449
  %647 = vmatprep.subr.bf16.mxu0 0
  %648 = vmatpush2.bf16.msra.mxu0 0
  %649 = vmatprep.subr.bf16.mxu0 0
  %650 = vmatpush2.bf16.msra.mxu0 0
  %651 = vmatprep.subr.bf16.mxu0 0
  %652 = vmatpush2.bf16.msra.mxu0 0
  %653 = vmatprep.subr.bf16.mxu0 0
  %654 = vmatpush2.bf16.msra.mxu0 0
  %655 = vmatprep.subr.bf16.mxu0 0
  %656 = vmatpush2.bf16.msra.mxu0 0
  %657 = vmatprep.subr.bf16.mxu0 0
  %658 = vmatpush2.bf16.msra.mxu0 0
  %659 = vmatprep.subr.bf16.mxu0 0
  %660 = vmatpush2.bf16.msra.mxu0 0
  %661 = vmatprep.subr.bf16.mxu0 0
  %662 = vmatpush2.bf16.msra.mxu0 0
  %663 = vmatprep.mubr.bf16.mxu0 0
  %664 = vmatmul.mubr.bf16.gmra.mxu0 %v139
  %v665 = vpop.f32.mrf.mxu0
  %v666 = vadd.f32 %v623, %v665
  %v667 = vpop.f32.mrf.mxu0
  %v668 = vadd.f32 %v625, %v667
  %v669 = vpop.f32.mrf.mxu0
  %v670 = vadd.f32 %v627, %v669
  %v671 = vpop.f32.mrf.mxu0
  %v672 = vadd.f32 %v629, %v671
  %673 = vdwg.mxu0
  %v674 = vmin.f32 %v666, 0.0
  %v675 = vmin.f32 %v668, 0.0
  %v676 = vmin.f32 %v670, 0.0
  %v677 = vmin.f32 %v672, 0.0
  %v678 = vmul.f32 %v674, 1.442695
  %v679 = vpow.pop %v678
  %v680 = vmul.f32 %v675, 1.442695
  %v681 = vpow.pop %v680
  %v682 = vmul.f32 %v676, 1.442695
  %v683 = vpow.pop %v682
  %v684 = vmul.f32 %v677, 1.442695
  %v685 = vpow.pop %v684
  %v686 = vsub.f32 %v679, 1.0
  %v687 = vsub.f32 %v681, 1.0
  %v688 = vsub.f32 %v683, 1.0
  %v689 = vsub.f32 %v685, 1.0
  %v690 = vmul.f32 %v686, 1.6732632
  %v691 = vmul.f32 %v687, 1.6732632
  %v692 = vmul.f32 %v688, 1.6732632
  %v693 = vmul.f32 %v689, 1.6732632
  %vm694 = vcmp.gt.f32.partialorder %v666, 0.0
  %vm695 = vcmp.gt.f32.partialorder %v668, 0.0
  %vm696 = vcmp.gt.f32.partialorder %v670, 0.0
  %vm697 = vcmp.gt.f32.partialorder %v672, 0.0
  %v698 = vsel %vm694, %v666, %v690
  %v699 = vsel %vm695, %v668, %v691
  %v700 = vsel %vm696, %v670, %v692
  %v701 = vsel %vm697, %v672, %v693
  %v702 = vmul.f32 %v698, 1.050701
  %v703 = vmul.f32 %v699, 1.050701
  %v704 = vmul.f32 %v700, 1.050701
  %v705 = vmul.f32 %v701, 1.050701
  %v706 = vpack.c.bf16 %v704, %v702
  %v707 = vpack.c.bf16 %v705, %v703
  %v708 = vld [vmem:[%s3] sm:$0xf]
  %v709 = vld [vmem:[%s3 + $0x4] sm:$0xf]
  %v710 = vld [vmem:[%s3 + $0x8] sm:$0xf]
  %v711 = vld [vmem:[%s3 + $0xc] sm:$0xf]
  %v712 = vld [vmem:[%s3 + $0x10] sm:$0xf]
  %v713 = vld [vmem:[%s3 + $0x14] sm:$0xf]
  %v714 = vld [vmem:[%s3 + $0x18] sm:$0xf]
  %v715 = vld [vmem:[%s3 + $0x1c] sm:$0xf]
  %v716 = vld [vmem:[%s3 + $0x20] sm:$0xf]
  %v717 = vld [vmem:[%s3 + $0x24] sm:$0xf]
  %v718 = vld [vmem:[%s3 + $0x28] sm:$0xf]
  %v719 = vld [vmem:[%s3 + $0x2c] sm:$0xf]
  %v720 = vld [vmem:[%s3 + $0x30] sm:$0xf]
  %v721 = vld [vmem:[%s3 + $0x34] sm:$0xf]
  %v722 = vld [vmem:[%s3 + $0x38] sm:$0xf]
  %v723 = vld [vmem:[%s3 + $0x3c] sm:$0xf]
  %v724 = vld [vmem:[%s3 + $0x40] sm:$0xf]
  %v725 = vld [vmem:[%s3 + $0x44] sm:$0xf]
  %v726 = vld [vmem:[%s3 + $0x48] sm:$0xf]
  %v727 = vld [vmem:[%s3 + $0x4c] sm:$0xf]
  %v728 = vld [vmem:[%s3 + $0x50] sm:$0xf]
  %v729 = vld [vmem:[%s3 + $0x54] sm:$0xf]
  %v730 = vld [vmem:[%s3 + $0x58] sm:$0xf]
  %v731 = vld [vmem:[%s3 + $0x5c] sm:$0xf]
  %v732 = vld [vmem:[%s3 + $0x60] sm:$0xf]
  %v733 = vld [vmem:[%s3 + $0x64] sm:$0xf]
  %v734 = vld [vmem:[%s3 + $0x68] sm:$0xf]
  %v735 = vld [vmem:[%s3 + $0x6c] sm:$0xf]
  %v736 = vld [vmem:[%s3 + $0x70] sm:$0xf]
  %v737 = vld [vmem:[%s3 + $0x74] sm:$0xf]
  %v738 = vld [vmem:[%s3 + $0x78] sm:$0xf]
  %v739 = vld [vmem:[%s3 + $0x7c] sm:$0xf]
  %v740 = vld [vmem:[%s4] sm:$0x1]
  %v742 = vlaneseq
  %v743 = vshrl.u32 %v742, 7
  %v744 = vsub.s32 0, %v743
  %v745 = vrot.slane %v740, %v744
  %v779 = vunpack.c.l.b16 %v708
  %v780 = vunpack.c.l.b16 %v709
  %v781 = vunpack.c.l.b16 %v710
  %v782 = vunpack.c.l.b16 %v711
  %v783 = vunpack.c.l.b16 %v712
  %v784 = vunpack.c.l.b16 %v713
  %v785 = vunpack.c.l.b16 %v714
  %v786 = vunpack.c.l.b16 %v715
  %v787 = vunpack.c.l.b16 %v716
  %v788 = vunpack.c.l.b16 %v717
  %v789 = vunpack.c.l.b16 %v718
  %v790 = vunpack.c.l.b16 %v719
  %v791 = vunpack.c.l.b16 %v720
  %v792 = vunpack.c.l.b16 %v721
  %v793 = vunpack.c.l.b16 %v722
  %v794 = vunpack.c.l.b16 %v723
  %v795 = vunpack.c.l.b16 %v724
  %v796 = vunpack.c.l.b16 %v725
  %v797 = vunpack.c.l.b16 %v726
  %v798 = vunpack.c.l.b16 %v727
  %v799 = vunpack.c.l.b16 %v728
  %v800 = vunpack.c.l.b16 %v729
  %v801 = vunpack.c.l.b16 %v730
  %v802 = vunpack.c.l.b16 %v731
  %v803 = vunpack.c.l.b16 %v732
  %v804 = vunpack.c.l.b16 %v733
  %v805 = vunpack.c.l.b16 %v734
  %v806 = vunpack.c.l.b16 %v735
  %v807 = vunpack.c.l.b16 %v736
  %v808 = vunpack.c.l.b16 %v737
  %v809 = vunpack.c.l.b16 %v738
  %v810 = vunpack.c.l.b16 %v739
  %v811 = vpack.c.b16 %v780, %v779
  %v812 = vpack.c.b16 %v782, %v781
  %v813 = vpack.c.b16 %v784, %v783
  %v814 = vpack.c.b16 %v786, %v785
  %v815 = vpack.c.b16 %v788, %v787
  %v816 = vpack.c.b16 %v790, %v789
  %v817 = vpack.c.b16 %v792, %v791
  %v818 = vpack.c.b16 %v794, %v793
  %v819 = vpack.c.b16 %v796, %v795
  %v820 = vpack.c.b16 %v798, %v797
  %v821 = vpack.c.b16 %v800, %v799
  %v822 = vpack.c.b16 %v802, %v801
  %v823 = vpack.c.b16 %v804, %v803
  %v824 = vpack.c.b16 %v806, %v805
  %v825 = vpack.c.b16 %v808, %v807
  %v826 = vpack.c.b16 %v810, %v809
  %843 = vmatprep.subr.bf16.mxu0 0
  %844 = vmatpush1.bf16.msra.mxu0 %v818
  %845 = vmatprep.subr.bf16.mxu0 0
  %846 = vmatpush1.bf16.msra.mxu0 %v817
  %847 = vmatprep.subr.bf16.mxu0 0
  %848 = vmatpush1.bf16.msra.mxu0 %v816
  %849 = vmatprep.subr.bf16.mxu0 0
  %850 = vmatpush1.bf16.msra.mxu0 %v815
  %851 = vmatprep.subr.bf16.mxu0 0
  %852 = vmatpush1.bf16.msra.mxu0 %v814
  %853 = vmatprep.subr.bf16.mxu0 0
  %854 = vmatpush1.bf16.msra.mxu0 %v813
  %855 = vmatprep.subr.bf16.mxu0 0
  %856 = vmatpush1.bf16.msra.mxu0 %v812
  %857 = vmatprep.subr.bf16.mxu0 0
  %858 = vmatpush1.bf16.msra.mxu0 %v811
  %859 = vmatprep.subr.bf16.mxu0 0
  %860 = vmatpush2.bf16.msra.mxu0 %v826
  %861 = vmatprep.subr.bf16.mxu0 0
  %862 = vmatpush2.bf16.msra.mxu0 %v825
  %863 = vmatprep.subr.bf16.mxu0 0
  %864 = vmatpush2.bf16.msra.mxu0 %v824
  %865 = vmatprep.subr.bf16.mxu0 0
  %866 = vmatpush2.bf16.msra.mxu0 %v823
  %867 = vmatprep.subr.bf16.mxu0 0
  %868 = vmatpush2.bf16.msra.mxu0 %v822
  %869 = vmatprep.subr.bf16.mxu0 0
  %870 = vmatpush2.bf16.msra.mxu0 %v821
  %871 = vmatprep.subr.bf16.mxu0 0
  %872 = vmatpush2.bf16.msra.mxu0 %v820
  %873 = vmatprep.subr.bf16.mxu0 0
  %874 = vmatpush2.bf16.msra.mxu0 %v819
  %875 = vmatprep.mubr.bf16.mxu0 %v707
  %876 = vmatmul.mubr.bf16.gmra.mxu0 %v706
  %v877 = vpop.f32.mrf.mxu0
  %v878 = vadd.f32 %v745, %v877
  %v879 = vpop.f32.mrf.mxu0
  %v880 = vpop.f32.mrf.mxu0
  %v881 = vadd.f32 %v745, %v880
  %v882 = vpop.f32.mrf.mxu0
  %883 = vdwg.mxu0
  %884 = vst [vmem:[%s5] sm:$0xff] %v878
  %885 = vst [vmem:[%s5 + $0x8] sm:$0xff] %v881
  // Predicated region
  $region22: #{fwd.13} parent=0 // pred_check
    _
  $region23: #{fwd.13} parent=0 // pred_check_branch
    %887 = sbr.rel (0) target = $region25
  $region24: #{fwd.13} parent=0 // pred_region
    _
  $region25: #{fwd.13} parent=0 // pred_fallthru
    _
  // Predicated region
  $region26: #{fwd.13} parent=0 // pred_check
    _
  $region27: #{fwd.13} parent=0 // pred_check_branch
    %889 = sbr.rel (0) target = $region29
  $region28: #{fwd.13} parent=0 // pred_region
    _
  $region29: #{fwd.13} parent=0 // pred_fallthru
    _

</llo_original>
